<compile_context>
chip_gen: v7x
topology: tpu7x:2x2x1
jax: 0.10.0
libtpu: 0.0.40
codegen_flags: <defaults>
</compile_context>

<pallas_src>
import jax
import jax.numpy as jnp
from jax.experimental import pallas as pl
from jax.experimental.pallas import tpu as pltpu


# ----------------------------------------------------------------------------
# Fully fused 5-layer CrossGCN forward kernel (everything VMEM-resident)
# ----------------------------------------------------------------------------
def _cross_gcn_kernel(x_ref, adj_ref, adjc_ref,
                      w1_ref, b1_ref, wc1_ref, bc1_ref,
                      w2_ref, b2_ref, wc2_ref, bc2_ref,
                      w3_ref, b3_ref, o_ref):

    def gcn(h_bf16, adj_bf16, w_ref, b_ref):
        # Projection X @ W (bf16 x bf16 -> f32 on the MXU), then aggregation
        # A_norm @ (X @ W), bias add and ReLU in f32, re-pack to bf16 for the
        # next layer's MXU operands.
        xw = jnp.dot(h_bf16, w_ref[...], preferred_element_type=jnp.float32)
        agg = jnp.dot(adj_bf16, xw.astype(jnp.bfloat16),
                      preferred_element_type=jnp.float32)
        out = jnp.maximum(agg + b_ref[...].astype(jnp.float32), 0.0)
        return out.astype(jnp.bfloat16)

    adj = adj_ref[...]       # loaded once, reused by layers 1, 3, 5
    adjc = adjc_ref[...]     # loaded once, reused by layers 2, 4

    h = gcn(x_ref[...], adj, w1_ref, b1_ref)
    h = gcn(h, adjc, wc1_ref, bc1_ref)
    h = gcn(h, adj, w2_ref, b2_ref)
    h = gcn(h, adjc, wc2_ref, bc2_ref)

    # Final layer: no ReLU, single f32 store of the output tile.
    xw = jnp.dot(h, w3_ref[...], preferred_element_type=jnp.float32)
    agg = jnp.dot(adj, xw.astype(jnp.bfloat16),
                  preferred_element_type=jnp.float32)
    o_ref[...] = (agg + b3_ref[...].astype(jnp.float32)).astype(o_ref.dtype)


@jax.jit
def cross_gcn_forward(x, adj, adj_cross, params):
    """CrossGCN.forward with dropout as identity (eval mode)."""
    n = x.shape[0]
    out_dim = params["w3"].shape[1]

    # Pre-cast MXU operands to bf16 once (under jit); biases stay f32.
    operands = (
        x.astype(jnp.bfloat16),
        adj.astype(jnp.bfloat16),
        adj_cross.astype(jnp.bfloat16),
        params["w1"].astype(jnp.bfloat16), params["b1"].astype(jnp.float32),
        params["wc1"].astype(jnp.bfloat16), params["bc1"].astype(jnp.float32),
        params["w2"].astype(jnp.bfloat16), params["b2"].astype(jnp.float32),
        params["wc2"].astype(jnp.bfloat16), params["bc2"].astype(jnp.float32),
        params["w3"].astype(jnp.bfloat16), params["b3"].astype(jnp.float32),
    )

    vmem_spec = pl.BlockSpec(memory_space=pltpu.MemorySpace.VMEM)
    out = pl.pallas_call(
        _cross_gcn_kernel,
        out_shape=jax.ShapeDtypeStruct((n, out_dim), jnp.float32),
        in_specs=[vmem_spec] * len(operands),
        out_specs=vmem_spec,
        compiler_params=pltpu.CompilerParams(vmem_limit_bytes=32 << 20),
    )(*operands)
    return jnp.squeeze(out)


# ----------------------------------------------------------------------------
# Pure-JAX reference (same bf16 operand / f32 accumulate numerics)
# ----------------------------------------------------------------------------
def _ref_matmul(a, b):
    return jnp.dot(a.astype(jnp.bfloat16), b.astype(jnp.bfloat16),
                   preferred_element_type=jnp.float32)


def _ref_gcn_layer(x, adj_norm, w, b, apply_relu):
    xw = _ref_matmul(x, w).astype(jnp.bfloat16)
    h = _ref_matmul(adj_norm, xw) + b.astype(jnp.float32)
    return jnp.maximum(h, 0.0) if apply_relu else h


def _ref_forward(x, adj, adj_cross, p):
    h = _ref_gcn_layer(x, adj, p["w1"], p["b1"], True)
    h = _ref_gcn_layer(h, adj_cross, p["wc1"], p["bc1"], True)
    h = _ref_gcn_layer(h, adj, p["w2"], p["b2"], True)
    h = _ref_gcn_layer(h, adj_cross, p["wc2"], p["bc2"], True)
    h = _ref_gcn_layer(h, adj, p["w3"], p["b3"], False)
    return jnp.squeeze(h)


# ----------------------------------------------------------------------------
# Deterministic example run
# ----------------------------------------------------------------------------
def _make_norm_adj(key, n, thresh):
    """Dense symmetric-normalized adjacency D^-1/2 (A + I) D^-1/2."""
    raw = (jax.random.uniform(key, (n, n)) > thresh).astype(jnp.float32)
    a = jnp.minimum(jnp.maximum(raw, raw.T) + jnp.eye(n, dtype=jnp.float32), 1.0)
    d_inv_sqrt = 1.0 / jnp.sqrt(jnp.sum(a, axis=1))
    return a * d_inv_sqrt[:, None] * d_inv_sqrt[None, :]


if __name__ == "__main__":
    # Lane-dense, tile-aligned shapes: 256 nodes, all feature dims = 128.
    N = 256
    IN_DIM = 128
    H1 = 128
    H2 = 128
    OUT_DIM = 128

    key = jax.random.PRNGKey(0)
    (k_x, k_a, k_ac, k_w1, k_b1, k_wc1, k_bc1, k_w2, k_b2,
     k_wc2, k_bc2, k_w3, k_b3) = jax.random.split(key, 13)

    x = jax.random.normal(k_x, (N, IN_DIM), dtype=jnp.float32)
    adj = _make_norm_adj(k_a, N, thresh=0.9)
    adj_cross = _make_norm_adj(k_ac, N, thresh=0.95)

    def _w(k, fin, fout):
        return jax.random.normal(k, (fin, fout), dtype=jnp.float32) * 0.1

    def _b(k, fout):
        return jax.random.normal(k, (1, fout), dtype=jnp.float32) * 0.01

    params = {
        "w1": _w(k_w1, IN_DIM, H1), "b1": _b(k_b1, H1),
        "wc1": _w(k_wc1, H1, H1), "bc1": _b(k_bc1, H1),
        "w2": _w(k_w2, H1, H2), "b2": _b(k_b2, H2),
        "wc2": _w(k_wc2, H2, H2), "bc2": _b(k_bc2, H2),
        "w3": _w(k_w3, H2, OUT_DIM), "b3": _b(k_b3, OUT_DIM),
    }

    out = cross_gcn_forward(x, adj, adj_cross, params)
    out = jax.block_until_ready(out)

    ref = _ref_forward(x, adj, adj_cross, params)
    assert out.shape == (N, OUT_DIM), out.shape
    assert jnp.allclose(out, ref, atol=2e-3, rtol=2e-3), \
        f"mismatch vs reference, max abs err={jnp.max(jnp.abs(out - ref))}"

    print("KERNEL_OK")
</pallas_src>

<mosaic_0001>
module attributes {stable_mosaic.version = 11 : i64} {
  func.func @_cross_gcn_kernel(%arg0: memref<256x128xbf16, #tpu.memory_space<vmem>>, %arg1: memref<256x256xbf16, #tpu.memory_space<vmem>>, %arg2: memref<256x256xbf16, #tpu.memory_space<vmem>>, %arg3: memref<128x128xbf16, #tpu.memory_space<vmem>>, %arg4: memref<1x128xf32, #tpu.memory_space<vmem>>, %arg5: memref<128x128xbf16, #tpu.memory_space<vmem>>, %arg6: memref<1x128xf32, #tpu.memory_space<vmem>>, %arg7: memref<128x128xbf16, #tpu.memory_space<vmem>>, %arg8: memref<1x128xf32, #tpu.memory_space<vmem>>, %arg9: memref<128x128xbf16, #tpu.memory_space<vmem>>, %arg10: memref<1x128xf32, #tpu.memory_space<vmem>>, %arg11: memref<128x128xbf16, #tpu.memory_space<vmem>>, %arg12: memref<1x128xf32, #tpu.memory_space<vmem>>, %arg13: memref<256x128xf32, #tpu.memory_space<vmem>>) attributes {dimension_semantics = [], scalar_prefetch = 0 : i64, scratch_operands = 0 : i64, tpu.core_type = #tpu.core_type<tc>} {
    %c0 = arith.constant 0 : index
    %c0_0 = arith.constant 0 : index
    %0 = vector.load %arg1[%c0, %c0_0] : memref<256x256xbf16, #tpu.memory_space<vmem>>, vector<256x256xbf16>
    %c0_1 = arith.constant 0 : index
    %c0_2 = arith.constant 0 : index
    %1 = vector.load %arg2[%c0_1, %c0_2] : memref<256x256xbf16, #tpu.memory_space<vmem>>, vector<256x256xbf16>
    %c0_3 = arith.constant 0 : index
    %c0_4 = arith.constant 0 : index
    %2 = vector.load %arg0[%c0_3, %c0_4] : memref<256x128xbf16, #tpu.memory_space<vmem>>, vector<256x128xbf16>
    %c0_5 = arith.constant 0 : index
    %c0_6 = arith.constant 0 : index
    %3 = vector.load %arg3[%c0_5, %c0_6] : memref<128x128xbf16, #tpu.memory_space<vmem>>, vector<128x128xbf16>
    %cst = arith.constant dense<0.000000e+00> : vector<256x128xf32>
    %4 = tpu.matmul %2, %3, %cst {dimension_numbers = #tpu.dot_dimension_numbers<[1], [0], [0], [1], [0, 0, 1, 1], [], []>} : vector<256x128xbf16>, vector<128x128xbf16>, vector<256x128xf32> -> vector<256x128xf32>
    %5 = arith.truncf %4 : vector<256x128xf32> to vector<256x128xbf16>
    %cst_7 = arith.constant dense<0.000000e+00> : vector<256x128xf32>
    %6 = tpu.matmul %0, %5, %cst_7 {dimension_numbers = #tpu.dot_dimension_numbers<[1], [0], [0], [1], [0, 0, 1, 1], [], []>} : vector<256x256xbf16>, vector<256x128xbf16>, vector<256x128xf32> -> vector<256x128xf32>
    %c0_8 = arith.constant 0 : index
    %c0_9 = arith.constant 0 : index
    %7 = vector.load %arg4[%c0_8, %c0_9] : memref<1x128xf32, #tpu.memory_space<vmem>>, vector<1x128xf32>
    %8 = vector.broadcast %7 : vector<1x128xf32> to vector<256x128xf32>
    %9 = arith.addf %6, %8 : vector<256x128xf32>
    %cst_10 = arith.constant 0.000000e+00 : f32
    %10 = vector.broadcast %cst_10 : f32 to vector<256x128xf32>
    %11 = arith.maximumf %9, %10 : vector<256x128xf32>
    %12 = arith.truncf %11 : vector<256x128xf32> to vector<256x128xbf16>
    %c0_11 = arith.constant 0 : index
    %c0_12 = arith.constant 0 : index
    %13 = vector.load %arg5[%c0_11, %c0_12] : memref<128x128xbf16, #tpu.memory_space<vmem>>, vector<128x128xbf16>
    %cst_13 = arith.constant dense<0.000000e+00> : vector<256x128xf32>
    %14 = tpu.matmul %12, %13, %cst_13 {dimension_numbers = #tpu.dot_dimension_numbers<[1], [0], [0], [1], [0, 0, 1, 1], [], []>} : vector<256x128xbf16>, vector<128x128xbf16>, vector<256x128xf32> -> vector<256x128xf32>
    %15 = arith.truncf %14 : vector<256x128xf32> to vector<256x128xbf16>
    %cst_14 = arith.constant dense<0.000000e+00> : vector<256x128xf32>
    %16 = tpu.matmul %1, %15, %cst_14 {dimension_numbers = #tpu.dot_dimension_numbers<[1], [0], [0], [1], [0, 0, 1, 1], [], []>} : vector<256x256xbf16>, vector<256x128xbf16>, vector<256x128xf32> -> vector<256x128xf32>
    %c0_15 = arith.constant 0 : index
    %c0_16 = arith.constant 0 : index
    %17 = vector.load %arg6[%c0_15, %c0_16] : memref<1x128xf32, #tpu.memory_space<vmem>>, vector<1x128xf32>
    %18 = vector.broadcast %17 : vector<1x128xf32> to vector<256x128xf32>
    %19 = arith.addf %16, %18 : vector<256x128xf32>
    %cst_17 = arith.constant 0.000000e+00 : f32
    %20 = vector.broadcast %cst_17 : f32 to vector<256x128xf32>
    %21 = arith.maximumf %19, %20 : vector<256x128xf32>
    %22 = arith.truncf %21 : vector<256x128xf32> to vector<256x128xbf16>
    %c0_18 = arith.constant 0 : index
    %c0_19 = arith.constant 0 : index
    %23 = vector.load %arg7[%c0_18, %c0_19] : memref<128x128xbf16, #tpu.memory_space<vmem>>, vector<128x128xbf16>
    %cst_20 = arith.constant dense<0.000000e+00> : vector<256x128xf32>
    %24 = tpu.matmul %22, %23, %cst_20 {dimension_numbers = #tpu.dot_dimension_numbers<[1], [0], [0], [1], [0, 0, 1, 1], [], []>} : vector<256x128xbf16>, vector<128x128xbf16>, vector<256x128xf32> -> vector<256x128xf32>
    %25 = arith.truncf %24 : vector<256x128xf32> to vector<256x128xbf16>
    %cst_21 = arith.constant dense<0.000000e+00> : vector<256x128xf32>
    %26 = tpu.matmul %0, %25, %cst_21 {dimension_numbers = #tpu.dot_dimension_numbers<[1], [0], [0], [1], [0, 0, 1, 1], [], []>} : vector<256x256xbf16>, vector<256x128xbf16>, vector<256x128xf32> -> vector<256x128xf32>
    %c0_22 = arith.constant 0 : index
    %c0_23 = arith.constant 0 : index
    %27 = vector.load %arg8[%c0_22, %c0_23] : memref<1x128xf32, #tpu.memory_space<vmem>>, vector<1x128xf32>
    %28 = vector.broadcast %27 : vector<1x128xf32> to vector<256x128xf32>
    %29 = arith.addf %26, %28 : vector<256x128xf32>
    %cst_24 = arith.constant 0.000000e+00 : f32
    %30 = vector.broadcast %cst_24 : f32 to vector<256x128xf32>
    %31 = arith.maximumf %29, %30 : vector<256x128xf32>
    %32 = arith.truncf %31 : vector<256x128xf32> to vector<256x128xbf16>
    %c0_25 = arith.constant 0 : index
    %c0_26 = arith.constant 0 : index
    %33 = vector.load %arg9[%c0_25, %c0_26] : memref<128x128xbf16, #tpu.memory_space<vmem>>, vector<128x128xbf16>
    %cst_27 = arith.constant dense<0.000000e+00> : vector<256x128xf32>
    %34 = tpu.matmul %32, %33, %cst_27 {dimension_numbers = #tpu.dot_dimension_numbers<[1], [0], [0], [1], [0, 0, 1, 1], [], []>} : vector<256x128xbf16>, vector<128x128xbf16>, vector<256x128xf32> -> vector<256x128xf32>
    %35 = arith.truncf %34 : vector<256x128xf32> to vector<256x128xbf16>
    %cst_28 = arith.constant dense<0.000000e+00> : vector<256x128xf32>
    %36 = tpu.matmul %1, %35, %cst_28 {dimension_numbers = #tpu.dot_dimension_numbers<[1], [0], [0], [1], [0, 0, 1, 1], [], []>} : vector<256x256xbf16>, vector<256x128xbf16>, vector<256x128xf32> -> vector<256x128xf32>
    %c0_29 = arith.constant 0 : index
    %c0_30 = arith.constant 0 : index
    %37 = vector.load %arg10[%c0_29, %c0_30] : memref<1x128xf32, #tpu.memory_space<vmem>>, vector<1x128xf32>
    %38 = vector.broadcast %37 : vector<1x128xf32> to vector<256x128xf32>
    %39 = arith.addf %36, %38 : vector<256x128xf32>
    %cst_31 = arith.constant 0.000000e+00 : f32
    %40 = vector.broadcast %cst_31 : f32 to vector<256x128xf32>
    %41 = arith.maximumf %39, %40 : vector<256x128xf32>
    %42 = arith.truncf %41 : vector<256x128xf32> to vector<256x128xbf16>
    %c0_32 = arith.constant 0 : index
    %c0_33 = arith.constant 0 : index
    %43 = vector.load %arg11[%c0_32, %c0_33] : memref<128x128xbf16, #tpu.memory_space<vmem>>, vector<128x128xbf16>
    %cst_34 = arith.constant dense<0.000000e+00> : vector<256x128xf32>
    %44 = tpu.matmul %42, %43, %cst_34 {dimension_numbers = #tpu.dot_dimension_numbers<[1], [0], [0], [1], [0, 0, 1, 1], [], []>} : vector<256x128xbf16>, vector<128x128xbf16>, vector<256x128xf32> -> vector<256x128xf32>
    %45 = arith.truncf %44 : vector<256x128xf32> to vector<256x128xbf16>
    %cst_35 = arith.constant dense<0.000000e+00> : vector<256x128xf32>
    %46 = tpu.matmul %0, %45, %cst_35 {dimension_numbers = #tpu.dot_dimension_numbers<[1], [0], [0], [1], [0, 0, 1, 1], [], []>} : vector<256x256xbf16>, vector<256x128xbf16>, vector<256x128xf32> -> vector<256x128xf32>
    %c0_36 = arith.constant 0 : index
    %c0_37 = arith.constant 0 : index
    %47 = vector.load %arg12[%c0_36, %c0_37] : memref<1x128xf32, #tpu.memory_space<vmem>>, vector<1x128xf32>
    %48 = vector.broadcast %47 : vector<1x128xf32> to vector<256x128xf32>
    %49 = arith.addf %46, %48 : vector<256x128xf32>
    %c0_38 = arith.constant 0 : index
    %c0_39 = arith.constant 0 : index
    %50 = vector.load %arg13[%c0_38, %c0_39] : memref<256x128xf32, #tpu.memory_space<vmem>>, vector<256x128xf32>
    tpu.vector_store %arg13[%c0_38, %c0_39], %49 {strides = array<i32>} : memref<256x128xf32, #tpu.memory_space<vmem>>, vector<256x128xf32>,
    return
  }
}

</mosaic_0001>

<llo_original>
// kernel: cross_gcn_forward.1
$region0: #{cross_gcn_forward.1}
  #allocation0 [shape = 'u32[]', space=smem, size = 0x4, offset = 0x4, fixed_abs, tag = 'smem constant byte address 0x4 - core index']
  #allocation1 [shape = 'u32[144,128]{1,0:T(1,128)}', space=vmem, size = 0x12000, scoped, tag = 'internal scratch']
  %s0 = inlined_call_operand.vmem [shape: bf16[256,128], index: 0, kind: input, shape index: {}]
  %s1 = inlined_call_operand.vmem [shape: bf16[256,256], index: 1, kind: input, shape index: {}]
  %s2 = inlined_call_operand.vmem [shape: bf16[256,256], index: 2, kind: input, shape index: {}]
  %s3 = inlined_call_operand.vmem [shape: bf16[128,128], index: 3, kind: input, shape index: {}]
  %s4 = inlined_call_operand.vmem [shape: f32[1,128], index: 4, kind: input, shape index: {}]
  %s5 = inlined_call_operand.vmem [shape: bf16[128,128], index: 5, kind: input, shape index: {}]
  %s6 = inlined_call_operand.vmem [shape: f32[1,128], index: 6, kind: input, shape index: {}]
  %s7 = inlined_call_operand.vmem [shape: bf16[128,128], index: 7, kind: input, shape index: {}]
  %s8 = inlined_call_operand.vmem [shape: f32[1,128], index: 8, kind: input, shape index: {}]
  %s9 = inlined_call_operand.vmem [shape: bf16[128,128], index: 9, kind: input, shape index: {}]
  %s10 = inlined_call_operand.vmem [shape: f32[1,128], index: 10, kind: input, shape index: {}]
  %s11 = inlined_call_operand.vmem [shape: bf16[128,128], index: 11, kind: input, shape index: {}]
  %s12 = inlined_call_operand.vmem [shape: f32[1,128], index: 12, kind: input, shape index: {}]
  %s13 = inlined_call_operand.hbm [shape: f32[256,128], index: 13, kind: output, shape index: {}]
  %s14 = sld [smem:[#allocation0]]
  $region62: #{cross_gcn_forward.1} parent=0
    _
  %s16 = ssub.s32 1, %s14
  %s17 = scalar_select 0, %s16, %s14
  $region1: #{cross_gcn_forward.1} parent=0
    #allocation2 [shape = 'u8[131072]{0}', space=vmem, size = 0x20000, scoped, tag = 'output window, operand 0, single buffered']
    #allocation3 [shape = 's32[1]{0}', space=sflag, size = 0x4, scoped, tag = 'scoped memory for cross_gcn_forward.1']
    %18 = vsyncpa [#allocation3], 0
    // Predicated region
    $region2: #{cross_gcn_forward.1} parent=1 // pred_check
      _
    $region3: #{cross_gcn_forward.1} parent=1 // pred_check_branch
      %20 = sbr.rel (0) target = $region5
    $region4: #{cross_gcn_forward.1} parent=1 // pred_region
      _
    $region5: #{cross_gcn_forward.1} parent=1 // pred_fallthru
      _
    // Predicated region
    $region6: #{cross_gcn_forward.1} parent=1 // pred_check
      _
    $region7: #{cross_gcn_forward.1} parent=1 // pred_check_branch
      %22 = sbr.rel (0) target = $region9
    $region8: #{cross_gcn_forward.1} parent=1 // pred_region
      _
    $region9: #{cross_gcn_forward.1} parent=1 // pred_fallthru
      _
    // Predicated region
    $region10: #{cross_gcn_forward.1} parent=1 // pred_check
      _
    $region11: #{cross_gcn_forward.1} parent=1 // pred_check_branch
      %24 = sbr.rel (0) target = $region13
    $region12: #{cross_gcn_forward.1} parent=1 // pred_region
      _
    $region13: #{cross_gcn_forward.1} parent=1 // pred_fallthru
      _
    // Predicated region
    $region14: #{cross_gcn_forward.1} parent=1 // pred_check
      _
    $region15: #{cross_gcn_forward.1} parent=1 // pred_check_branch
      %26 = sbr.rel (0) target = $region17
    $region16: #{cross_gcn_forward.1} parent=1 // pred_region
      _
    $region17: #{cross_gcn_forward.1} parent=1 // pred_fallthru
      _
    // Predicated region
    $region18: #{cross_gcn_forward.1} parent=1 // pred_check
      _
    $region19: #{cross_gcn_forward.1} parent=1 // pred_check_branch
      %28 = sbr.rel (0) target = $region21
    $region20: #{cross_gcn_forward.1} parent=1 // pred_region
      _
    $region21: #{cross_gcn_forward.1} parent=1 // pred_fallthru
      _
    // Predicated region
    $region22: #{cross_gcn_forward.1} parent=1 // pred_check
      _
    $region23: #{cross_gcn_forward.1} parent=1 // pred_check_branch
      %30 = sbr.rel (0) target = $region25
    $region24: #{cross_gcn_forward.1} parent=1 // pred_region
      _
    $region25: #{cross_gcn_forward.1} parent=1 // pred_fallthru
      _
    // Predicated region
    $region26: #{cross_gcn_forward.1} parent=1 // pred_check
      _
    $region27: #{cross_gcn_forward.1} parent=1 // pred_check_branch
      %32 = sbr.rel (0) target = $region29
    $region28: #{cross_gcn_forward.1} parent=1 // pred_region
      _
    $region29: #{cross_gcn_forward.1} parent=1 // pred_fallthru
      _
    // Predicated region
    $region30: #{cross_gcn_forward.1} parent=1 // pred_check
      _
    $region31: #{cross_gcn_forward.1} parent=1 // pred_check_branch
      %34 = sbr.rel (0) target = $region33
    $region32: #{cross_gcn_forward.1} parent=1 // pred_region
      _
    $region33: #{cross_gcn_forward.1} parent=1 // pred_fallthru
      _
    // Predicated region
    $region34: #{cross_gcn_forward.1} parent=1 // pred_check
      _
    $region35: #{cross_gcn_forward.1} parent=1 // pred_check_branch
      %36 = sbr.rel (0) target = $region37
    $region36: #{cross_gcn_forward.1} parent=1 // pred_region
      _
    $region37: #{cross_gcn_forward.1} parent=1 // pred_fallthru
      _
    // Predicated region
    $region38: #{cross_gcn_forward.1} parent=1 // pred_check
      _
    $region39: #{cross_gcn_forward.1} parent=1 // pred_check_branch
      %38 = sbr.rel (0) target = $region41
    $region40: #{cross_gcn_forward.1} parent=1 // pred_region
      _
    $region41: #{cross_gcn_forward.1} parent=1 // pred_fallthru
      _
    // Predicated region
    $region42: #{cross_gcn_forward.1} parent=1 // pred_check
      _
    $region43: #{cross_gcn_forward.1} parent=1 // pred_check_branch
      %40 = sbr.rel (0) target = $region45
    $region44: #{cross_gcn_forward.1} parent=1 // pred_region
      _
    $region45: #{cross_gcn_forward.1} parent=1 // pred_fallthru
      _
    // Predicated region
    $region46: #{cross_gcn_forward.1} parent=1 // pred_check
      _
    $region47: #{cross_gcn_forward.1} parent=1 // pred_check_branch
      %42 = sbr.rel (0) target = $region49
    $region48: #{cross_gcn_forward.1} parent=1 // pred_region
      _
    $region49: #{cross_gcn_forward.1} parent=1 // pred_fallthru
      _
    // Predicated region
    $region50: #{cross_gcn_forward.1} parent=1 // pred_check
      _
    $region51: #{cross_gcn_forward.1} parent=1 // pred_check_branch
      %44 = sbr.rel (0) target = $region53
    $region52: #{cross_gcn_forward.1} parent=1 // pred_region
      _
    $region53: #{cross_gcn_forward.1} parent=1 // pred_fallthru
      _
    %v46 = vld [vmem:[%s1] sm:$0xff]
    %v47 = vld [vmem:[%s1 + $0x8] sm:$0xff]
    %v48 = vld [vmem:[%s1 + $0x10] sm:$0xff]
    %v49 = vld [vmem:[%s1 + $0x18] sm:$0xff]
    %v50 = vld [vmem:[%s1 + $0x20] sm:$0xff]
    %v51 = vld [vmem:[%s1 + $0x28] sm:$0xff]
    %v52 = vld [vmem:[%s1 + $0x30] sm:$0xff]
    %v53 = vld [vmem:[%s1 + $0x38] sm:$0xff]
    %v54 = vld [vmem:[%s1 + $0x40] sm:$0xff]
    %v55 = vld [vmem:[%s1 + $0x48] sm:$0xff]
    %v56 = vld [vmem:[%s1 + $0x50] sm:$0xff]
    %v57 = vld [vmem:[%s1 + $0x58] sm:$0xff]
    %v58 = vld [vmem:[%s1 + $0x60] sm:$0xff]
    %v59 = vld [vmem:[%s1 + $0x68] sm:$0xff]
    %v60 = vld [vmem:[%s1 + $0x70] sm:$0xff]
    %v61 = vld [vmem:[%s1 + $0x78] sm:$0xff]
    %v62 = vld [vmem:[%s1 + $0x80] sm:$0xff]
    %v63 = vld [vmem:[%s1 + $0x88] sm:$0xff]
    %v64 = vld [vmem:[%s1 + $0x90] sm:$0xff]
    %v65 = vld [vmem:[%s1 + $0x98] sm:$0xff]
    %v66 = vld [vmem:[%s1 + $0xa0] sm:$0xff]
    %v67 = vld [vmem:[%s1 + $0xa8] sm:$0xff]
    %v68 = vld [vmem:[%s1 + $0xb0] sm:$0xff]
    %v69 = vld [vmem:[%s1 + $0xb8] sm:$0xff]
    %v70 = vld [vmem:[%s1 + $0xc0] sm:$0xff]
    %v71 = vld [vmem:[%s1 + $0xc8] sm:$0xff]
    %v72 = vld [vmem:[%s1 + $0xd0] sm:$0xff]
    %v73 = vld [vmem:[%s1 + $0xd8] sm:$0xff]
    %v74 = vld [vmem:[%s1 + $0xe0] sm:$0xff]
    %v75 = vld [vmem:[%s1 + $0xe8] sm:$0xff]
    %v76 = vld [vmem:[%s1 + $0xf0] sm:$0xff]
    %v77 = vld [vmem:[%s1 + $0xf8] sm:$0xff]
    %v78 = vld [vmem:[%s2] sm:$0xff]
    %v79 = vld [vmem:[%s2 + $0x8] sm:$0xff]
    %v80 = vld [vmem:[%s2 + $0x10] sm:$0xff]
    %v81 = vld [vmem:[%s2 + $0x18] sm:$0xff]
    %v82 = vld [vmem:[%s2 + $0x20] sm:$0xff]
    %v83 = vld [vmem:[%s2 + $0x28] sm:$0xff]
    %v84 = vld [vmem:[%s2 + $0x30] sm:$0xff]
    %v85 = vld [vmem:[%s2 + $0x38] sm:$0xff]
    %v86 = vld [vmem:[%s2 + $0x40] sm:$0xff]
    %v87 = vld [vmem:[%s2 + $0x48] sm:$0xff]
    %v88 = vld [vmem:[%s2 + $0x50] sm:$0xff]
    %v89 = vld [vmem:[%s2 + $0x58] sm:$0xff]
    %v90 = vld [vmem:[%s2 + $0x60] sm:$0xff]
    %v91 = vld [vmem:[%s2 + $0x68] sm:$0xff]
    %v92 = vld [vmem:[%s2 + $0x70] sm:$0xff]
    %v93 = vld [vmem:[%s2 + $0x78] sm:$0xff]
    %v94 = vld [vmem:[%s2 + $0x80] sm:$0xff]
    %v95 = vld [vmem:[%s2 + $0x88] sm:$0xff]
    %v96 = vld [vmem:[%s2 + $0x90] sm:$0xff]
    %v97 = vld [vmem:[%s2 + $0x98] sm:$0xff]
    %v98 = vld [vmem:[%s2 + $0xa0] sm:$0xff]
    %v99 = vld [vmem:[%s2 + $0xa8] sm:$0xff]
    %v100 = vld [vmem:[%s2 + $0xb0] sm:$0xff]
    %v101 = vld [vmem:[%s2 + $0xb8] sm:$0xff]
    %v102 = vld [vmem:[%s2 + $0xc0] sm:$0xff]
    %v103 = vld [vmem:[%s2 + $0xc8] sm:$0xff]
    %v104 = vld [vmem:[%s2 + $0xd0] sm:$0xff]
    %v105 = vld [vmem:[%s2 + $0xd8] sm:$0xff]
    %v106 = vld [vmem:[%s2 + $0xe0] sm:$0xff]
    %v107 = vld [vmem:[%s2 + $0xe8] sm:$0xff]
    %v108 = vld [vmem:[%s2 + $0xf0] sm:$0xff]
    %v109 = vld [vmem:[%s2 + $0xf8] sm:$0xff]
    %v110 = vld [vmem:[%s0] sm:$0xf]
    %v111 = vld [vmem:[%s0 + $0x4] sm:$0xf]
    %v112 = vld [vmem:[%s0 + $0x8] sm:$0xf]
    %v113 = vld [vmem:[%s0 + $0xc] sm:$0xf]
    %v114 = vld [vmem:[%s0 + $0x10] sm:$0xf]
    %v115 = vld [vmem:[%s0 + $0x14] sm:$0xf]
    %v116 = vld [vmem:[%s0 + $0x18] sm:$0xf]
    %v117 = vld [vmem:[%s0 + $0x1c] sm:$0xf]
    %v118 = vld [vmem:[%s0 + $0x20] sm:$0xf]
    %v119 = vld [vmem:[%s0 + $0x24] sm:$0xf]
    %v120 = vld [vmem:[%s0 + $0x28] sm:$0xf]
    %v121 = vld [vmem:[%s0 + $0x2c] sm:$0xf]
    %v122 = vld [vmem:[%s0 + $0x30] sm:$0xf]
    %v123 = vld [vmem:[%s0 + $0x34] sm:$0xf]
    %v124 = vld [vmem:[%s0 + $0x38] sm:$0xf]
    %v125 = vld [vmem:[%s0 + $0x3c] sm:$0xf]
    %v126 = vld [vmem:[%s0 + $0x40] sm:$0xf]
    %v127 = vld [vmem:[%s0 + $0x44] sm:$0xf]
    %v128 = vld [vmem:[%s0 + $0x48] sm:$0xf]
    %v129 = vld [vmem:[%s0 + $0x4c] sm:$0xf]
    %v130 = vld [vmem:[%s0 + $0x50] sm:$0xf]
    %v131 = vld [vmem:[%s0 + $0x54] sm:$0xf]
    %v132 = vld [vmem:[%s0 + $0x58] sm:$0xf]
    %v133 = vld [vmem:[%s0 + $0x5c] sm:$0xf]
    %v134 = vld [vmem:[%s0 + $0x60] sm:$0xf]
    %v135 = vld [vmem:[%s0 + $0x64] sm:$0xf]
    %v136 = vld [vmem:[%s0 + $0x68] sm:$0xf]
    %v137 = vld [vmem:[%s0 + $0x6c] sm:$0xf]
    %v138 = vld [vmem:[%s0 + $0x70] sm:$0xf]
    %v139 = vld [vmem:[%s0 + $0x74] sm:$0xf]
    %v140 = vld [vmem:[%s0 + $0x78] sm:$0xf]
    %v141 = vld [vmem:[%s0 + $0x7c] sm:$0xf]
    %v142 = vld [vmem:[%s3] sm:$0xf]
    %v143 = vld [vmem:[%s3 + $0x4] sm:$0xf]
    %v144 = vld [vmem:[%s3 + $0x8] sm:$0xf]
    %v145 = vld [vmem:[%s3 + $0xc] sm:$0xf]
    %v146 = vld [vmem:[%s3 + $0x10] sm:$0xf]
    %v147 = vld [vmem:[%s3 + $0x14] sm:$0xf]
    %v148 = vld [vmem:[%s3 + $0x18] sm:$0xf]
    %v149 = vld [vmem:[%s3 + $0x1c] sm:$0xf]
    %v150 = vld [vmem:[%s3 + $0x20] sm:$0xf]
    %v151 = vld [vmem:[%s3 + $0x24] sm:$0xf]
    %v152 = vld [vmem:[%s3 + $0x28] sm:$0xf]
    %v153 = vld [vmem:[%s3 + $0x2c] sm:$0xf]
    %v154 = vld [vmem:[%s3 + $0x30] sm:$0xf]
    %v155 = vld [vmem:[%s3 + $0x34] sm:$0xf]
    %v156 = vld [vmem:[%s3 + $0x38] sm:$0xf]
    %v157 = vld [vmem:[%s3 + $0x3c] sm:$0xf]
    %v190 = vunpack.c.l.b16 %v110
    %v191 = vunpack.c.l.b16 %v111
    %v192 = vunpack.c.l.b16 %v112
    %v193 = vunpack.c.l.b16 %v113
    %v194 = vunpack.c.l.b16 %v114
    %v195 = vunpack.c.l.b16 %v115
    %v196 = vunpack.c.l.b16 %v116
    %v197 = vunpack.c.l.b16 %v117
    %v198 = vunpack.c.l.b16 %v118
    %v199 = vunpack.c.l.b16 %v119
    %v200 = vunpack.c.l.b16 %v120
    %v201 = vunpack.c.l.b16 %v121
    %v202 = vunpack.c.l.b16 %v122
    %v203 = vunpack.c.l.b16 %v123
    %v204 = vunpack.c.l.b16 %v124
    %v205 = vunpack.c.l.b16 %v125
    %v206 = vunpack.c.l.b16 %v126
    %v207 = vunpack.c.l.b16 %v127
    %v208 = vunpack.c.l.b16 %v128
    %v209 = vunpack.c.l.b16 %v129
    %v210 = vunpack.c.l.b16 %v130
    %v211 = vunpack.c.l.b16 %v131
    %v212 = vunpack.c.l.b16 %v132
    %v213 = vunpack.c.l.b16 %v133
    %v214 = vunpack.c.l.b16 %v134
    %v215 = vunpack.c.l.b16 %v135
    %v216 = vunpack.c.l.b16 %v136
    %v217 = vunpack.c.l.b16 %v137
    %v218 = vunpack.c.l.b16 %v138
    %v219 = vunpack.c.l.b16 %v139
    %v220 = vunpack.c.l.b16 %v140
    %v221 = vunpack.c.l.b16 %v141
    %v222 = vpack.c.b16 %v191, %v190
    %v223 = vpack.c.b16 %v193, %v192
    %v224 = vpack.c.b16 %v195, %v194
    %v225 = vpack.c.b16 %v197, %v196
    %v226 = vpack.c.b16 %v199, %v198
    %v227 = vpack.c.b16 %v201, %v200
    %v228 = vpack.c.b16 %v203, %v202
    %v229 = vpack.c.b16 %v205, %v204
    %v230 = vpack.c.b16 %v207, %v206
    %v231 = vpack.c.b16 %v209, %v208
    %v232 = vpack.c.b16 %v211, %v210
    %v233 = vpack.c.b16 %v213, %v212
    %v234 = vpack.c.b16 %v215, %v214
    %v235 = vpack.c.b16 %v217, %v216
    %v236 = vpack.c.b16 %v219, %v218
    %v237 = vpack.c.b16 %v221, %v220
    %v270 = vunpack.c.l.b16 %v142
    %v271 = vunpack.c.l.b16 %v143
    %v272 = vunpack.c.l.b16 %v144
    %v273 = vunpack.c.l.b16 %v145
    %v274 = vunpack.c.l.b16 %v146
    %v275 = vunpack.c.l.b16 %v147
    %v276 = vunpack.c.l.b16 %v148
    %v277 = vunpack.c.l.b16 %v149
    %v278 = vunpack.c.l.b16 %v150
    %v279 = vunpack.c.l.b16 %v151
    %v280 = vunpack.c.l.b16 %v152
    %v281 = vunpack.c.l.b16 %v153
    %v282 = vunpack.c.l.b16 %v154
    %v283 = vunpack.c.l.b16 %v155
    %v284 = vunpack.c.l.b16 %v156
    %v285 = vunpack.c.l.b16 %v157
    %v286 = vpack.c.b16 %v271, %v270
    %v287 = vpack.c.b16 %v273, %v272
    %v288 = vpack.c.b16 %v275, %v274
    %v289 = vpack.c.b16 %v277, %v276
    %v290 = vpack.c.b16 %v279, %v278
    %v291 = vpack.c.b16 %v281, %v280
    %v292 = vpack.c.b16 %v283, %v282
    %v293 = vpack.c.b16 %v285, %v284
    %302 = vmatprep.subr.bf16.mxu0 0
    %303 = vmatpush1.bf16.msra.mxu0 %v286
    %304 = vmatprep.subr.bf16.mxu0 0
    %305 = vmatpush1.bf16.msra.mxu0 %v287
    %306 = vmatprep.subr.bf16.mxu0 0
    %307 = vmatpush1.bf16.msra.mxu0 %v288
    %308 = vmatprep.subr.bf16.mxu0 0
    %309 = vmatpush1.bf16.msra.mxu0 %v289
    %310 = vmatprep.subr.bf16.mxu0 0
    %311 = vmatpush1.bf16.msra.mxu0 %v290
    %312 = vmatprep.subr.bf16.mxu0 0
    %313 = vmatpush1.bf16.msra.mxu0 %v291
    %314 = vmatprep.subr.bf16.mxu0 0
    %315 = vmatpush1.bf16.msra.mxu0 %v292
    %316 = vmatprep.subr.bf16.mxu0 0
    %317 = vmatpush1.bf16.msra.mxu0 %v293
    %318 = vmatprep.subr.bf16.mxu0 0
    %319 = vmatpush1.bf16.msra.mxu0 0
    %320 = vmatprep.subr.bf16.mxu0 0
    %321 = vmatpush1.bf16.msra.mxu0 0
    %322 = vmatprep.subr.bf16.mxu0 0
    %323 = vmatpush1.bf16.msra.mxu0 0
    %324 = vmatprep.subr.bf16.mxu0 0
    %325 = vmatpush1.bf16.msra.mxu0 0
    %326 = vmatprep.subr.bf16.mxu0 0
    %327 = vmatpush1.bf16.msra.mxu0 0
    %328 = vmatprep.subr.bf16.mxu0 0
    %329 = vmatpush1.bf16.msra.mxu0 0
    %330 = vmatprep.subr.bf16.mxu0 0
    %331 = vmatpush1.bf16.msra.mxu0 0
    %332 = vmatprep.subr.bf16.mxu0 0
    %333 = vmatpush1.bf16.msra.mxu0 0
    %334 = vmatprep.mubr.bf16.mxu0 0
    %335 = vmatmul.mubr.bf16.gmra.mrb[0].mxu0 %v222
    %v336 = vpop.f32.mrb[0].mxu0
    %v337 = vadd.f32 0.0, %v336
    %v338 = vpop.f32.mrb[0].mxu0
    %v339 = vpop.f32.mrb[0].mxu0
    %v340 = vadd.f32 0.0, %v339
    %v341 = vpop.f32.mrb[0].mxu0
    %342 = vmatprep.mubr.bf16.mxu0 0
    %343 = vmatmul.mubr.bf16.gmra.mrb[0].mxu0 %v223
    %v344 = vpop.f32.mrb[0].mxu0
    %v345 = vadd.f32 0.0, %v344
    %v346 = vpop.f32.mrb[0].mxu0
    %v347 = vpop.f32.mrb[0].mxu0
    %v348 = vadd.f32 0.0, %v347
    %v349 = vpop.f32.mrb[0].mxu0
    %350 = vmatprep.mubr.bf16.mxu0 0
    %351 = vmatmul.mubr.bf16.gmra.mrb[0].mxu0 %v224
    %v352 = vpop.f32.mrb[0].mxu0
    %v353 = vadd.f32 0.0, %v352
    %v354 = vpop.f32.mrb[0].mxu0
    %v355 = vpop.f32.mrb[0].mxu0
    %v356 = vadd.f32 0.0, %v355
    %v357 = vpop.f32.mrb[0].mxu0
    %358 = vmatprep.mubr.bf16.mxu0 0
    %359 = vmatmul.mubr.bf16.gmra.mrb[0].mxu0 %v225
    %v360 = vpop.f32.mrb[0].mxu0
    %v361 = vadd.f32 0.0, %v360
    %v362 = vpop.f32.mrb[0].mxu0
    %v363 = vpop.f32.mrb[0].mxu0
    %v364 = vadd.f32 0.0, %v363
    %v365 = vpop.f32.mrb[0].mxu0
    %366 = vmatprep.mubr.bf16.mxu0 0
    %367 = vmatmul.mubr.bf16.gmra.mrb[0].mxu0 %v226
    %v368 = vpop.f32.mrb[0].mxu0
    %v369 = vadd.f32 0.0, %v368
    %v370 = vpop.f32.mrb[0].mxu0
    %v371 = vpop.f32.mrb[0].mxu0
    %v372 = vadd.f32 0.0, %v371
    %v373 = vpop.f32.mrb[0].mxu0
    %374 = vmatprep.mubr.bf16.mxu0 0
    %375 = vmatmul.mubr.bf16.gmra.mrb[0].mxu0 %v227
    %v376 = vpop.f32.mrb[0].mxu0
    %v377 = vadd.f32 0.0, %v376
    %v378 = vpop.f32.mrb[0].mxu0
    %v379 = vpop.f32.mrb[0].mxu0
    %v380 = vadd.f32 0.0, %v379
    %v381 = vpop.f32.mrb[0].mxu0
    %382 = vmatprep.mubr.bf16.mxu0 0
    %383 = vmatmul.mubr.bf16.gmra.mrb[0].mxu0 %v228
    %v384 = vpop.f32.mrb[0].mxu0
    %v385 = vadd.f32 0.0, %v384
    %v386 = vpop.f32.mrb[0].mxu0
    %v387 = vpop.f32.mrb[0].mxu0
    %v388 = vadd.f32 0.0, %v387
    %v389 = vpop.f32.mrb[0].mxu0
    %390 = vmatprep.mubr.bf16.mxu0 0
    %391 = vmatmul.mubr.bf16.gmra.mrb[0].mxu0 %v229
    %v392 = vpop.f32.mrb[0].mxu0
    %v393 = vadd.f32 0.0, %v392
    %v394 = vpop.f32.mrb[0].mxu0
    %v395 = vpop.f32.mrb[0].mxu0
    %v396 = vadd.f32 0.0, %v395
    %v397 = vpop.f32.mrb[0].mxu0
    %398 = vmatprep.mubr.bf16.mxu0 0
    %399 = vmatmul.mubr.bf16.gmra.mrb[0].mxu0 %v230
    %v400 = vpop.f32.mrb[0].mxu0
    %v401 = vadd.f32 0.0, %v400
    %v402 = vpop.f32.mrb[0].mxu0
    %v403 = vpop.f32.mrb[0].mxu0
    %v404 = vadd.f32 0.0, %v403
    %v405 = vpop.f32.mrb[0].mxu0
    %406 = vmatprep.mubr.bf16.mxu0 0
    %407 = vmatmul.mubr.bf16.gmra.mrb[0].mxu0 %v231
    %v408 = vpop.f32.mrb[0].mxu0
    %v409 = vadd.f32 0.0, %v408
    %v410 = vpop.f32.mrb[0].mxu0
    %v411 = vpop.f32.mrb[0].mxu0
    %v412 = vadd.f32 0.0, %v411
    %v413 = vpop.f32.mrb[0].mxu0
    %414 = vmatprep.mubr.bf16.mxu0 0
    %415 = vmatmul.mubr.bf16.gmra.mrb[0].mxu0 %v232
    %v416 = vpop.f32.mrb[0].mxu0
    %v417 = vadd.f32 0.0, %v416
    %v418 = vpop.f32.mrb[0].mxu0
    %v419 = vpop.f32.mrb[0].mxu0
    %v420 = vadd.f32 0.0, %v419
    %v421 = vpop.f32.mrb[0].mxu0
    %422 = vmatprep.mubr.bf16.mxu0 0
    %423 = vmatmul.mubr.bf16.gmra.mrb[0].mxu0 %v233
    %v424 = vpop.f32.mrb[0].mxu0
    %v425 = vadd.f32 0.0, %v424
    %v426 = vpop.f32.mrb[0].mxu0
    %v427 = vpop.f32.mrb[0].mxu0
    %v428 = vadd.f32 0.0, %v427
    %v429 = vpop.f32.mrb[0].mxu0
    %430 = vmatprep.mubr.bf16.mxu0 0
    %431 = vmatmul.mubr.bf16.gmra.mrb[0].mxu0 %v234
    %v432 = vpop.f32.mrb[0].mxu0
    %v433 = vadd.f32 0.0, %v432
    %v434 = vpop.f32.mrb[0].mxu0
    %v435 = vpop.f32.mrb[0].mxu0
    %v436 = vadd.f32 0.0, %v435
    %v437 = vpop.f32.mrb[0].mxu0
    %438 = vmatprep.mubr.bf16.mxu0 0
    %439 = vmatmul.mubr.bf16.gmra.mrb[0].mxu0 %v235
    %v440 = vpop.f32.mrb[0].mxu0
    %v441 = vadd.f32 0.0, %v440
    %v442 = vpop.f32.mrb[0].mxu0
    %v443 = vpop.f32.mrb[0].mxu0
    %v444 = vadd.f32 0.0, %v443
    %v445 = vpop.f32.mrb[0].mxu0
    %446 = vmatprep.mubr.bf16.mxu0 0
    %447 = vmatmul.mubr.bf16.gmra.mrb[0].mxu0 %v236
    %v448 = vpop.f32.mrb[0].mxu0
    %v449 = vadd.f32 0.0, %v448
    %v450 = vpop.f32.mrb[0].mxu0
    %v451 = vpop.f32.mrb[0].mxu0
    %v452 = vadd.f32 0.0, %v451
    %v453 = vpop.f32.mrb[0].mxu0
    %454 = vmatprep.mubr.bf16.mxu0 0
    %455 = vmatmul.mubr.bf16.gmra.mrb[0].mxu0 %v237
    %v456 = vpop.f32.mrb[0].mxu0
    %v457 = vadd.f32 0.0, %v456
    %v458 = vpop.f32.mrb[0].mxu0
    %v459 = vpop.f32.mrb[0].mxu0
    %v460 = vadd.f32 0.0, %v459
    %v461 = vpop.f32.mrb[0].mxu0
    %462 = vdwg.mxu0
    %v463 = vpack.c.bf16 %v340, %v337
    %v464 = vpack.c.bf16 %v348, %v345
    %v465 = vpack.c.bf16 %v356, %v353
    %v466 = vpack.c.bf16 %v364, %v361
    %v467 = vpack.c.bf16 %v372, %v369
    %v468 = vpack.c.bf16 %v380, %v377
    %v469 = vpack.c.bf16 %v388, %v385
    %v470 = vpack.c.bf16 %v396, %v393
    %v471 = vpack.c.bf16 %v404, %v401
    %v472 = vpack.c.bf16 %v412, %v409
    %v473 = vpack.c.bf16 %v420, %v417
    %v474 = vpack.c.bf16 %v428, %v425
    %v475 = vpack.c.bf16 %v436, %v433
    %v476 = vpack.c.bf16 %v444, %v441
    %v477 = vpack.c.bf16 %v452, %v449
    %v478 = vpack.c.bf16 %v460, %v457
    %v479 = vld [vmem:[%s4] sm:$0x1]
    %v481 = vlaneseq
    %v482 = vshrl.u32 %v481, 7
    %v483 = vsub.s32 0, %v482
    %v484 = vrot.slane %v479, %v483
    %v518 = vunpack.c.l.b16 %v46
    %v519 = vunpack.c.h.b16 %v46
    %v520 = vunpack.c.l.b16 %v47
    %v521 = vunpack.c.h.b16 %v47
    %v522 = vunpack.c.l.b16 %v48
    %v523 = vunpack.c.h.b16 %v48
    %v524 = vunpack.c.l.b16 %v49
    %v525 = vunpack.c.h.b16 %v49
    %v526 = vunpack.c.l.b16 %v50
    %v527 = vunpack.c.h.b16 %v50
    %v528 = vunpack.c.l.b16 %v51
    %v529 = vunpack.c.h.b16 %v51
    %v530 = vunpack.c.l.b16 %v52
    %v531 = vunpack.c.h.b16 %v52
    %v532 = vunpack.c.l.b16 %v53
    %v533 = vunpack.c.h.b16 %v53
    %v534 = vunpack.c.l.b16 %v54
    %v535 = vunpack.c.h.b16 %v54
    %v536 = vunpack.c.l.b16 %v55
    %v537 = vunpack.c.h.b16 %v55
    %v538 = vunpack.c.l.b16 %v56
    %v539 = vunpack.c.h.b16 %v56
    %v540 = vunpack.c.l.b16 %v57
    %v541 = vunpack.c.h.b16 %v57
    %v542 = vunpack.c.l.b16 %v58
    %v543 = vunpack.c.h.b16 %v58
    %v544 = vunpack.c.l.b16 %v59
    %v545 = vunpack.c.h.b16 %v59
    %v546 = vunpack.c.l.b16 %v60
    %v547 = vunpack.c.h.b16 %v60
    %v548 = vunpack.c.l.b16 %v61
    %v549 = vunpack.c.h.b16 %v61
    %v550 = vunpack.c.l.b16 %v62
    %v551 = vunpack.c.h.b16 %v62
    %v552 = vunpack.c.l.b16 %v63
    %v553 = vunpack.c.h.b16 %v63
    %v554 = vunpack.c.l.b16 %v64
    %v555 = vunpack.c.h.b16 %v64
    %v556 = vunpack.c.l.b16 %v65
    %v557 = vunpack.c.h.b16 %v65
    %v558 = vunpack.c.l.b16 %v66
    %v559 = vunpack.c.h.b16 %v66
    %v560 = vunpack.c.l.b16 %v67
    %v561 = vunpack.c.h.b16 %v67
    %v562 = vunpack.c.l.b16 %v68
    %v563 = vunpack.c.h.b16 %v68
    %v564 = vunpack.c.l.b16 %v69
    %v565 = vunpack.c.h.b16 %v69
    %v566 = vunpack.c.l.b16 %v70
    %v567 = vunpack.c.h.b16 %v70
    %v568 = vunpack.c.l.b16 %v71
    %v569 = vunpack.c.h.b16 %v71
    %v570 = vunpack.c.l.b16 %v72
    %v571 = vunpack.c.h.b16 %v72
    %v572 = vunpack.c.l.b16 %v73
    %v573 = vunpack.c.h.b16 %v73
    %v574 = vunpack.c.l.b16 %v74
    %v575 = vunpack.c.h.b16 %v74
    %v576 = vunpack.c.l.b16 %v75
    %v577 = vunpack.c.h.b16 %v75
    %v578 = vunpack.c.l.b16 %v76
    %v579 = vunpack.c.h.b16 %v76
    %v580 = vunpack.c.l.b16 %v77
    %v581 = vunpack.c.h.b16 %v77
    %v582 = vpack.c.b16 %v520, %v518
    %v583 = vpack.c.b16 %v521, %v519
    %v584 = vpack.c.b16 %v524, %v522
    %v585 = vpack.c.b16 %v525, %v523
    %v586 = vpack.c.b16 %v528, %v526
    %v587 = vpack.c.b16 %v529, %v527
    %v588 = vpack.c.b16 %v532, %v530
    %v589 = vpack.c.b16 %v533, %v531
    %v590 = vpack.c.b16 %v536, %v534
    %v591 = vpack.c.b16 %v537, %v535
    %v592 = vpack.c.b16 %v540, %v538
    %v593 = vpack.c.b16 %v541, %v539
    %v594 = vpack.c.b16 %v544, %v542
    %v595 = vpack.c.b16 %v545, %v543
    %v596 = vpack.c.b16 %v548, %v546
    %v597 = vpack.c.b16 %v549, %v547
    %v598 = vpack.c.b16 %v552, %v550
    %v599 = vpack.c.b16 %v553, %v551
    %v600 = vpack.c.b16 %v556, %v554
    %v601 = vpack.c.b16 %v557, %v555
    %v602 = vpack.c.b16 %v560, %v558
    %v603 = vpack.c.b16 %v561, %v559
    %v604 = vpack.c.b16 %v564, %v562
    %v605 = vpack.c.b16 %v565, %v563
    %v606 = vpack.c.b16 %v568, %v566
    %v607 = vpack.c.b16 %v569, %v567
    %v608 = vpack.c.b16 %v572, %v570
    %v609 = vpack.c.b16 %v573, %v571
    %v610 = vpack.c.b16 %v576, %v574
    %v611 = vpack.c.b16 %v577, %v575
    %v612 = vpack.c.b16 %v580, %v578
    %v613 = vpack.c.b16 %v581, %v579
    %646 = vmatprep.subr.bf16.mxu0 0
    %647 = vmatpush1.bf16.msra.mxu0 %v463
    %648 = vmatprep.subr.bf16.mxu0 0
    %649 = vmatpush1.bf16.msra.mxu0 %v464
    %650 = vmatprep.subr.bf16.mxu0 0
    %651 = vmatpush1.bf16.msra.mxu0 %v465
    %652 = vmatprep.subr.bf16.mxu0 0
    %653 = vmatpush1.bf16.msra.mxu0 %v466
    %654 = vmatprep.subr.bf16.mxu0 0
    %655 = vmatpush1.bf16.msra.mxu0 %v467
    %656 = vmatprep.subr.bf16.mxu0 0
    %657 = vmatpush1.bf16.msra.mxu0 %v468
    %658 = vmatprep.subr.bf16.mxu0 0
    %659 = vmatpush1.bf16.msra.mxu0 %v469
    %660 = vmatprep.subr.bf16.mxu0 0
    %661 = vmatpush1.bf16.msra.mxu0 %v470
    %662 = vmatprep.subr.bf16.mxu0 0
    %663 = vmatpush1.bf16.msra.mxu0 %v471
    %664 = vmatprep.subr.bf16.mxu0 0
    %665 = vmatpush1.bf16.msra.mxu0 %v472
    %666 = vmatprep.subr.bf16.mxu0 0
    %667 = vmatpush1.bf16.msra.mxu0 %v473
    %668 = vmatprep.subr.bf16.mxu0 0
    %669 = vmatpush1.bf16.msra.mxu0 %v474
    %670 = vmatprep.subr.bf16.mxu0 0
    %671 = vmatpush1.bf16.msra.mxu0 %v475
    %672 = vmatprep.subr.bf16.mxu0 0
    %673 = vmatpush1.bf16.msra.mxu0 %v476
    %674 = vmatprep.subr.bf16.mxu0 0
    %675 = vmatpush1.bf16.msra.mxu0 %v477
    %676 = vmatprep.subr.bf16.mxu0 0
    %677 = vmatpush1.bf16.msra.mxu0 %v478
    %678 = vmatprep.mubr.bf16.mxu0 %v583
    %679 = vmatmul.mubr.bf16.gmra.mrb[0].mxu0 %v582
    %v680 = vpop.f32.mrb[0].mxu0
    %v681 = vadd.f32 %v484, %v680
    %v682 = vpop.f32.mrb[0].mxu0
    %v683 = vpop.f32.mrb[0].mxu0
    %v684 = vadd.f32 %v484, %v683
    %v685 = vpop.f32.mrb[0].mxu0
    %686 = vmatprep.mubr.bf16.mxu0 %v585
    %687 = vmatmul.mubr.bf16.gmra.mrb[0].mxu0 %v584
    %v688 = vpop.f32.mrb[0].mxu0
    %v689 = vadd.f32 %v484, %v688
    %v690 = vpop.f32.mrb[0].mxu0
    %v691 = vpop.f32.mrb[0].mxu0
    %v692 = vadd.f32 %v484, %v691
    %v693 = vpop.f32.mrb[0].mxu0
    %694 = vmatprep.mubr.bf16.mxu0 %v587
    %695 = vmatmul.mubr.bf16.gmra.mrb[0].mxu0 %v586
    %v696 = vpop.f32.mrb[0].mxu0
    %v697 = vadd.f32 %v484, %v696
    %v698 = vpop.f32.mrb[0].mxu0
    %v699 = vpop.f32.mrb[0].mxu0
    %v700 = vadd.f32 %v484, %v699
    %v701 = vpop.f32.mrb[0].mxu0
    %702 = vmatprep.mubr.bf16.mxu0 %v589
    %703 = vmatmul.mubr.bf16.gmra.mrb[0].mxu0 %v588
    %v704 = vpop.f32.mrb[0].mxu0
    %v705 = vadd.f32 %v484, %v704
    %v706 = vpop.f32.mrb[0].mxu0
    %v707 = vpop.f32.mrb[0].mxu0
    %v708 = vadd.f32 %v484, %v707
    %v709 = vpop.f32.mrb[0].mxu0
    %710 = vmatprep.mubr.bf16.mxu0 %v591
    %711 = vmatmul.mubr.bf16.gmra.mrb[0].mxu0 %v590
    %v712 = vpop.f32.mrb[0].mxu0
    %v713 = vadd.f32 %v484, %v712
    %v714 = vpop.f32.mrb[0].mxu0
    %v715 = vpop.f32.mrb[0].mxu0
    %v716 = vadd.f32 %v484, %v715
    %v717 = vpop.f32.mrb[0].mxu0
    %718 = vmatprep.mubr.bf16.mxu0 %v593
    %719 = vmatmul.mubr.bf16.gmra.mrb[0].mxu0 %v592
    %v720 = vpop.f32.mrb[0].mxu0
    %v721 = vadd.f32 %v484, %v720
    %v722 = vpop.f32.mrb[0].mxu0
    %v723 = vpop.f32.mrb[0].mxu0
    %v724 = vadd.f32 %v484, %v723
    %v725 = vpop.f32.mrb[0].mxu0
    %726 = vmatprep.mubr.bf16.mxu0 %v595
    %727 = vmatmul.mubr.bf16.gmra.mrb[0].mxu0 %v594
    %v728 = vpop.f32.mrb[0].mxu0
    %v729 = vadd.f32 %v484, %v728
    %v730 = vpop.f32.mrb[0].mxu0
    %v731 = vpop.f32.mrb[0].mxu0
    %v732 = vadd.f32 %v484, %v731
    %v733 = vpop.f32.mrb[0].mxu0
    %734 = vmatprep.mubr.bf16.mxu0 %v597
    %735 = vmatmul.mubr.bf16.gmra.mrb[0].mxu0 %v596
    %v736 = vpop.f32.mrb[0].mxu0
    %v737 = vadd.f32 %v484, %v736
    %v738 = vpop.f32.mrb[0].mxu0
    %v739 = vpop.f32.mrb[0].mxu0
    %v740 = vadd.f32 %v484, %v739
    %v741 = vpop.f32.mrb[0].mxu0
    %742 = vmatprep.mubr.bf16.mxu0 %v599
    %743 = vmatmul.mubr.bf16.gmra.mrb[0].mxu0 %v598
    %v744 = vpop.f32.mrb[0].mxu0
    %v745 = vadd.f32 %v484, %v744
    %v746 = vpop.f32.mrb[0].mxu0
    %v747 = vpop.f32.mrb[0].mxu0
    %v748 = vadd.f32 %v484, %v747
    %v749 = vpop.f32.mrb[0].mxu0
    %750 = vmatprep.mubr.bf16.mxu0 %v601
    %751 = vmatmul.mubr.bf16.gmra.mrb[0].mxu0 %v600
    %v752 = vpop.f32.mrb[0].mxu0
    %v753 = vadd.f32 %v484, %v752
    %v754 = vpop.f32.mrb[0].mxu0
    %v755 = vpop.f32.mrb[0].mxu0
    %v756 = vadd.f32 %v484, %v755
    %v757 = vpop.f32.mrb[0].mxu0
    %758 = vmatprep.mubr.bf16.mxu0 %v603
    %759 = vmatmul.mubr.bf16.gmra.mrb[0].mxu0 %v602
    %v760 = vpop.f32.mrb[0].mxu0
    %v761 = vadd.f32 %v484, %v760
    %v762 = vpop.f32.mrb[0].mxu0
    %v763 = vpop.f32.mrb[0].mxu0
    %v764 = vadd.f32 %v484, %v763
    %v765 = vpop.f32.mrb[0].mxu0
    %766 = vmatprep.mubr.bf16.mxu0 %v605
    %767 = vmatmul.mubr.bf16.gmra.mrb[0].mxu0 %v604
    %v768 = vpop.f32.mrb[0].mxu0
    %v769 = vadd.f32 %v484, %v768
    %v770 = vpop.f32.mrb[0].mxu0
    %v771 = vpop.f32.mrb[0].mxu0
    %v772 = vadd.f32 %v484, %v771
    %v773 = vpop.f32.mrb[0].mxu0
    %774 = vmatprep.mubr.bf16.mxu0 %v607
    %775 = vmatmul.mubr.bf16.gmra.mrb[0].mxu0 %v606
    %v776 = vpop.f32.mrb[0].mxu0
    %v777 = vadd.f32 %v484, %v776
    %v778 = vpop.f32.mrb[0].mxu0
    %v779 = vpop.f32.mrb[0].mxu0
    %v780 = vadd.f32 %v484, %v779
    %v781 = vpop.f32.mrb[0].mxu0
    %782 = vmatprep.mubr.bf16.mxu0 %v609
    %783 = vmatmul.mubr.bf16.gmra.mrb[0].mxu0 %v608
    %v784 = vpop.f32.mrb[0].mxu0
    %v785 = vadd.f32 %v484, %v784
    %v786 = vpop.f32.mrb[0].mxu0
    %v787 = vpop.f32.mrb[0].mxu0
    %v788 = vadd.f32 %v484, %v787
    %v789 = vpop.f32.mrb[0].mxu0
    %790 = vmatprep.mubr.bf16.mxu0 %v611
    %791 = vmatmul.mubr.bf16.gmra.mrb[0].mxu0 %v610
    %v792 = vpop.f32.mrb[0].mxu0
    %v793 = vadd.f32 %v484, %v792
    %v794 = vpop.f32.mrb[0].mxu0
    %v795 = vpop.f32.mrb[0].mxu0
    %v796 = vadd.f32 %v484, %v795
    %v797 = vpop.f32.mrb[0].mxu0
    %798 = vmatprep.mubr.bf16.mxu0 %v613
    %799 = vmatmul.mubr.bf16.gmra.mrb[0].mxu0 %v612
    %v800 = vpop.f32.mrb[0].mxu0
    %v801 = vadd.f32 %v484, %v800
    %v802 = vpop.f32.mrb[0].mxu0
    %v803 = vpop.f32.mrb[0].mxu0
    %v804 = vadd.f32 %v484, %v803
    %v805 = vpop.f32.mrb[0].mxu0
    %806 = vdwg.mxu0
    %v807 = vmax.f32 %v681, 0.0
    %v808 = vmax.f32 %v684, 0.0
    %v809 = vmax.f32 %v689, 0.0
    %v810 = vmax.f32 %v692, 0.0
    %v811 = vmax.f32 %v697, 0.0
    %v812 = vmax.f32 %v700, 0.0
    %v813 = vmax.f32 %v705, 0.0
    %v814 = vmax.f32 %v708, 0.0
    %v815 = vmax.f32 %v713, 0.0
    %v816 = vmax.f32 %v716, 0.0
    %v817 = vmax.f32 %v721, 0.0
    %v818 = vmax.f32 %v724, 0.0
    %v819 = vmax.f32 %v729, 0.0
    %v820 = vmax.f32 %v732, 0.0
    %v821 = vmax.f32 %v737, 0.0
    %v822 = vmax.f32 %v740, 0.0
    %v823 = vmax.f32 %v745, 0.0
    %v824 = vmax.f32 %v748, 0.0
    %v825 = vmax.f32 %v753, 0.0
    %v826 = vmax.f32 %v756, 0.0
    %v827 = vmax.f32 %v761, 0.0
    %v828 = vmax.f32 %v764, 0.0
    %v829 = vmax.f32 %v769, 0.0
    %v830 = vmax.f32 %v772, 0.0
    %v831 = vmax.f32 %v777, 0.0
    %v832 = vmax.f32 %v780, 0.0
    %v833 = vmax.f32 %v785, 0.0
    %v834 = vmax.f32 %v788, 0.0
    %v835 = vmax.f32 %v793, 0.0
    %v836 = vmax.f32 %v796, 0.0
    %v837 = vmax.f32 %v801, 0.0
    %v838 = vmax.f32 %v804, 0.0
    %v839 = vpack.c.bf16 %v808, %v807
    %v840 = vpack.c.bf16 %v810, %v809
    %v841 = vpack.c.bf16 %v812, %v811
    %v842 = vpack.c.bf16 %v814, %v813
    %v843 = vpack.c.bf16 %v816, %v815
    %v844 = vpack.c.bf16 %v818, %v817
    %v845 = vpack.c.bf16 %v820, %v819
    %v846 = vpack.c.bf16 %v822, %v821
    %v847 = vpack.c.bf16 %v824, %v823
    %v848 = vpack.c.bf16 %v826, %v825
    %v849 = vpack.c.bf16 %v828, %v827
    %v850 = vpack.c.bf16 %v830, %v829
    %v851 = vpack.c.bf16 %v832, %v831
    %v852 = vpack.c.bf16 %v834, %v833
    %v853 = vpack.c.bf16 %v836, %v835
    %v854 = vpack.c.bf16 %v838, %v837
    %v855 = vld [vmem:[%s5] sm:$0xf]
    %v856 = vld [vmem:[%s5 + $0x4] sm:$0xf]
    %v857 = vld [vmem:[%s5 + $0x8] sm:$0xf]
    %v858 = vld [vmem:[%s5 + $0xc] sm:$0xf]
    %v859 = vld [vmem:[%s5 + $0x10] sm:$0xf]
    %v860 = vld [vmem:[%s5 + $0x14] sm:$0xf]
    %v861 = vld [vmem:[%s5 + $0x18] sm:$0xf]
    %v862 = vld [vmem:[%s5 + $0x1c] sm:$0xf]
    %v863 = vld [vmem:[%s5 + $0x20] sm:$0xf]
    %v864 = vld [vmem:[%s5 + $0x24] sm:$0xf]
    %v865 = vld [vmem:[%s5 + $0x28] sm:$0xf]
    %v866 = vld [vmem:[%s5 + $0x2c] sm:$0xf]
    %v867 = vld [vmem:[%s5 + $0x30] sm:$0xf]
    %v868 = vld [vmem:[%s5 + $0x34] sm:$0xf]
    %v869 = vld [vmem:[%s5 + $0x38] sm:$0xf]
    %v870 = vld [vmem:[%s5 + $0x3c] sm:$0xf]
    %v887 = vunpack.c.l.b16 %v855
    %v888 = vunpack.c.l.b16 %v856
    %v889 = vunpack.c.l.b16 %v857
    %v890 = vunpack.c.l.b16 %v858
    %v891 = vunpack.c.l.b16 %v859
    %v892 = vunpack.c.l.b16 %v860
    %v893 = vunpack.c.l.b16 %v861
    %v894 = vunpack.c.l.b16 %v862
    %v895 = vunpack.c.l.b16 %v863
    %v896 = vunpack.c.l.b16 %v864
    %v897 = vunpack.c.l.b16 %v865
    %v898 = vunpack.c.l.b16 %v866
    %v899 = vunpack.c.l.b16 %v867
    %v900 = vunpack.c.l.b16 %v868
    %v901 = vunpack.c.l.b16 %v869
    %v902 = vunpack.c.l.b16 %v870
    %v903 = vpack.c.b16 %v888, %v887
    %v904 = vpack.c.b16 %v890, %v889
    %v905 = vpack.c.b16 %v892, %v891
    %v906 = vpack.c.b16 %v894, %v893
    %v907 = vpack.c.b16 %v896, %v895
    %v908 = vpack.c.b16 %v898, %v897
    %v909 = vpack.c.b16 %v900, %v899
    %v910 = vpack.c.b16 %v902, %v901
    %919 = vmatprep.subr.bf16.mxu0 0
    %920 = vmatpush1.bf16.msra.mxu0 %v903
    %921 = vmatprep.subr.bf16.mxu0 0
    %922 = vmatpush1.bf16.msra.mxu0 %v904
    %923 = vmatprep.subr.bf16.mxu0 0
    %924 = vmatpush1.bf16.msra.mxu0 %v905
    %925 = vmatprep.subr.bf16.mxu0 0
    %926 = vmatpush1.bf16.msra.mxu0 %v906
    %927 = vmatprep.subr.bf16.mxu0 0
    %928 = vmatpush1.bf16.msra.mxu0 %v907
    %929 = vmatprep.subr.bf16.mxu0 0
    %930 = vmatpush1.bf16.msra.mxu0 %v908
    %931 = vmatprep.subr.bf16.mxu0 0
    %932 = vmatpush1.bf16.msra.mxu0 %v909
    %933 = vmatprep.subr.bf16.mxu0 0
    %934 = vmatpush1.bf16.msra.mxu0 %v910
    %935 = vmatprep.subr.bf16.mxu0 0
    %936 = vmatpush1.bf16.msra.mxu0 0
    %937 = vmatprep.subr.bf16.mxu0 0
    %938 = vmatpush1.bf16.msra.mxu0 0
    %939 = vmatprep.subr.bf16.mxu0 0
    %940 = vmatpush1.bf16.msra.mxu0 0
    %941 = vmatprep.subr.bf16.mxu0 0
    %942 = vmatpush1.bf16.msra.mxu0 0
    %943 = vmatprep.subr.bf16.mxu0 0
    %944 = vmatpush1.bf16.msra.mxu0 0
    %945 = vmatprep.subr.bf16.mxu0 0
    %946 = vmatpush1.bf16.msra.mxu0 0
    %947 = vmatprep.subr.bf16.mxu0 0
    %948 = vmatpush1.bf16.msra.mxu0 0
    %949 = vmatprep.subr.bf16.mxu0 0
    %950 = vmatpush1.bf16.msra.mxu0 0
    %951 = vmatprep.mubr.bf16.mxu0 0
    %952 = vmatmul.mubr.bf16.gmra.mrb[0].mxu0 %v839
    %v953 = vpop.f32.mrb[0].mxu0
    %v954 = vadd.f32 0.0, %v953
    %v955 = vpop.f32.mrb[0].mxu0
    %v956 = vpop.f32.mrb[0].mxu0
    %v957 = vadd.f32 0.0, %v956
    %v958 = vpop.f32.mrb[0].mxu0
    %959 = vmatprep.mubr.bf16.mxu0 0
    %960 = vmatmul.mubr.bf16.gmra.mrb[0].mxu0 %v840
    %v961 = vpop.f32.mrb[0].mxu0
    %v962 = vadd.f32 0.0, %v961
    %v963 = vpop.f32.mrb[0].mxu0
    %v964 = vpop.f32.mrb[0].mxu0
    %v965 = vadd.f32 0.0, %v964
    %v966 = vpop.f32.mrb[0].mxu0
    %967 = vmatprep.mubr.bf16.mxu0 0
    %968 = vmatmul.mubr.bf16.gmra.mrb[0].mxu0 %v841
    %v969 = vpop.f32.mrb[0].mxu0
    %v970 = vadd.f32 0.0, %v969
    %v971 = vpop.f32.mrb[0].mxu0
    %v972 = vpop.f32.mrb[0].mxu0
    %v973 = vadd.f32 0.0, %v972
    %v974 = vpop.f32.mrb[0].mxu0
    %975 = vmatprep.mubr.bf16.mxu0 0
    %976 = vmatmul.mubr.bf16.gmra.mrb[0].mxu0 %v842
    %v977 = vpop.f32.mrb[0].mxu0
    %v978 = vadd.f32 0.0, %v977
    %v979 = vpop.f32.mrb[0].mxu0
    %v980 = vpop.f32.mrb[0].mxu0
    %v981 = vadd.f32 0.0, %v980
    %v982 = vpop.f32.mrb[0].mxu0
    %983 = vmatprep.mubr.bf16.mxu0 0
    %984 = vmatmul.mubr.bf16.gmra.mrb[0].mxu0 %v843
    %v985 = vpop.f32.mrb[0].mxu0
    %v986 = vadd.f32 0.0, %v985
    %v987 = vpop.f32.mrb[0].mxu0
    %v988 = vpop.f32.mrb[0].mxu0
    %v989 = vadd.f32 0.0, %v988
    %v990 = vpop.f32.mrb[0].mxu0
    %991 = vmatprep.mubr.bf16.mxu0 0
    %992 = vmatmul.mubr.bf16.gmra.mrb[0].mxu0 %v844
    %v993 = vpop.f32.mrb[0].mxu0
    %v994 = vadd.f32 0.0, %v993
    %v995 = vpop.f32.mrb[0].mxu0
    %v996 = vpop.f32.mrb[0].mxu0
    %v997 = vadd.f32 0.0, %v996
    %v998 = vpop.f32.mrb[0].mxu0
    %999 = vmatprep.mubr.bf16.mxu0 0
    %1000 = vmatmul.mubr.bf16.gmra.mrb[0].mxu0 %v845
    %v1001 = vpop.f32.mrb[0].mxu0
    %v1002 = vadd.f32 0.0, %v1001
    %v1003 = vpop.f32.mrb[0].mxu0
    %v1004 = vpop.f32.mrb[0].mxu0
    %v1005 = vadd.f32 0.0, %v1004
    %v1006 = vpop.f32.mrb[0].mxu0
    %1007 = vmatprep.mubr.bf16.mxu0 0
    %1008 = vmatmul.mubr.bf16.gmra.mrb[0].mxu0 %v846
    %v1009 = vpop.f32.mrb[0].mxu0
    %v1010 = vadd.f32 0.0, %v1009
    %v1011 = vpop.f32.mrb[0].mxu0
    %v1012 = vpop.f32.mrb[0].mxu0
    %v1013 = vadd.f32 0.0, %v1012
    %v1014 = vpop.f32.mrb[0].mxu0
    %1015 = vmatprep.mubr.bf16.mxu0 0
    %1016 = vmatmul.mubr.bf16.gmra.mrb[0].mxu0 %v847
    %v1017 = vpop.f32.mrb[0].mxu0
    %v1018 = vadd.f32 0.0, %v1017
    %v1019 = vpop.f32.mrb[0].mxu0
    %v1020 = vpop.f32.mrb[0].mxu0
    %v1021 = vadd.f32 0.0, %v1020
    %v1022 = vpop.f32.mrb[0].mxu0
    %1023 = vmatprep.mubr.bf16.mxu0 0
    %1024 = vmatmul.mubr.bf16.gmra.mrb[0].mxu0 %v848
    %v1025 = vpop.f32.mrb[0].mxu0
    %v1026 = vadd.f32 0.0, %v1025
    %v1027 = vpop.f32.mrb[0].mxu0
    %v1028 = vpop.f32.mrb[0].mxu0
    %v1029 = vadd.f32 0.0, %v1028
    %v1030 = vpop.f32.mrb[0].mxu0
    %1031 = vmatprep.mubr.bf16.mxu0 0
    %1032 = vmatmul.mubr.bf16.gmra.mrb[0].mxu0 %v849
    %v1033 = vpop.f32.mrb[0].mxu0
    %v1034 = vadd.f32 0.0, %v1033
    %v1035 = vpop.f32.mrb[0].mxu0
    %v1036 = vpop.f32.mrb[0].mxu0
    %v1037 = vadd.f32 0.0, %v1036
    %v1038 = vpop.f32.mrb[0].mxu0
    %1039 = vmatprep.mubr.bf16.mxu0 0
    %1040 = vmatmul.mubr.bf16.gmra.mrb[0].mxu0 %v850
    %v1041 = vpop.f32.mrb[0].mxu0
    %v1042 = vadd.f32 0.0, %v1041
    %v1043 = vpop.f32.mrb[0].mxu0
    %v1044 = vpop.f32.mrb[0].mxu0
    %v1045 = vadd.f32 0.0, %v1044
    %v1046 = vpop.f32.mrb[0].mxu0
    %1047 = vmatprep.mubr.bf16.mxu0 0
    %1048 = vmatmul.mubr.bf16.gmra.mrb[0].mxu0 %v851
    %v1049 = vpop.f32.mrb[0].mxu0
    %v1050 = vadd.f32 0.0, %v1049
    %v1051 = vpop.f32.mrb[0].mxu0
    %v1052 = vpop.f32.mrb[0].mxu0
    %v1053 = vadd.f32 0.0, %v1052
    %v1054 = vpop.f32.mrb[0].mxu0
    %1055 = vmatprep.mubr.bf16.mxu0 0
    %1056 = vmatmul.mubr.bf16.gmra.mrb[0].mxu0 %v852
    %v1057 = vpop.f32.mrb[0].mxu0
    %v1058 = vadd.f32 0.0, %v1057
    %v1059 = vpop.f32.mrb[0].mxu0
    %v1060 = vpop.f32.mrb[0].mxu0
    %v1061 = vadd.f32 0.0, %v1060
    %v1062 = vpop.f32.mrb[0].mxu0
    %1063 = vmatprep.mubr.bf16.mxu0 0
    %1064 = vmatmul.mubr.bf16.gmra.mrb[0].mxu0 %v853
    %v1065 = vpop.f32.mrb[0].mxu0
    %v1066 = vadd.f32 0.0, %v1065
    %v1067 = vpop.f32.mrb[0].mxu0
    %v1068 = vpop.f32.mrb[0].mxu0
    %v1069 = vadd.f32 0.0, %v1068
    %v1070 = vpop.f32.mrb[0].mxu0
    %1071 = vmatprep.mubr.bf16.mxu0 0
    %1072 = vmatmul.mubr.bf16.gmra.mrb[0].mxu0 %v854
    %v1073 = vpop.f32.mrb[0].mxu0
    %v1074 = vadd.f32 0.0, %v1073
    %v1075 = vpop.f32.mrb[0].mxu0
    %v1076 = vpop.f32.mrb[0].mxu0
    %v1077 = vadd.f32 0.0, %v1076
    %v1078 = vpop.f32.mrb[0].mxu0
    %1079 = vdwg.mxu0
    %v1080 = vpack.c.bf16 %v957, %v954
    %v1081 = vpack.c.bf16 %v965, %v962
    %v1082 = vpack.c.bf16 %v973, %v970
    %v1083 = vpack.c.bf16 %v981, %v978
    %v1084 = vpack.c.bf16 %v989, %v986
    %v1085 = vpack.c.bf16 %v997, %v994
    %v1086 = vpack.c.bf16 %v1005, %v1002
    %v1087 = vpack.c.bf16 %v1013, %v1010
    %v1088 = vpack.c.bf16 %v1021, %v1018
    %v1089 = vpack.c.bf16 %v1029, %v1026
    %v1090 = vpack.c.bf16 %v1037, %v1034
    %v1091 = vpack.c.bf16 %v1045, %v1042
    %v1092 = vpack.c.bf16 %v1053, %v1050
    %v1093 = vpack.c.bf16 %v1061, %v1058
    %v1094 = vpack.c.bf16 %v1069, %v1066
    %v1095 = vpack.c.bf16 %v1077, %v1074
    %v1096 = vld [vmem:[%s6] sm:$0x1]
    %v1098 = vlaneseq
    %v1099 = vshrl.u32 %v1098, 7
    %v1100 = vsub.s32 0, %v1099
    %v1101 = vrot.slane %v1096, %v1100
    %v1135 = vunpack.c.l.b16 %v78
    %v1136 = vunpack.c.h.b16 %v78
    %v1137 = vunpack.c.l.b16 %v79
    %v1138 = vunpack.c.h.b16 %v79
    %v1139 = vunpack.c.l.b16 %v80
    %v1140 = vunpack.c.h.b16 %v80
    %v1141 = vunpack.c.l.b16 %v81
    %v1142 = vunpack.c.h.b16 %v81
    %v1143 = vunpack.c.l.b16 %v82
    %v1144 = vunpack.c.h.b16 %v82
    %v1145 = vunpack.c.l.b16 %v83
    %v1146 = vunpack.c.h.b16 %v83
    %v1147 = vunpack.c.l.b16 %v84
    %v1148 = vunpack.c.h.b16 %v84
    %v1149 = vunpack.c.l.b16 %v85
    %v1150 = vunpack.c.h.b16 %v85
    %v1151 = vunpack.c.l.b16 %v86
    %v1152 = vunpack.c.h.b16 %v86
    %v1153 = vunpack.c.l.b16 %v87
    %v1154 = vunpack.c.h.b16 %v87
    %v1155 = vunpack.c.l.b16 %v88
    %v1156 = vunpack.c.h.b16 %v88
    %v1157 = vunpack.c.l.b16 %v89
    %v1158 = vunpack.c.h.b16 %v89
    %v1159 = vunpack.c.l.b16 %v90
    %v1160 = vunpack.c.h.b16 %v90
    %v1161 = vunpack.c.l.b16 %v91
    %v1162 = vunpack.c.h.b16 %v91
    %v1163 = vunpack.c.l.b16 %v92
    %v1164 = vunpack.c.h.b16 %v92
    %v1165 = vunpack.c.l.b16 %v93
    %v1166 = vunpack.c.h.b16 %v93
    %v1167 = vunpack.c.l.b16 %v94
    %v1168 = vunpack.c.h.b16 %v94
    %v1169 = vunpack.c.l.b16 %v95
    %v1170 = vunpack.c.h.b16 %v95
    %v1171 = vunpack.c.l.b16 %v96
    %v1172 = vunpack.c.h.b16 %v96
    %v1173 = vunpack.c.l.b16 %v97
    %v1174 = vunpack.c.h.b16 %v97
    %v1175 = vunpack.c.l.b16 %v98
    %v1176 = vunpack.c.h.b16 %v98
    %v1177 = vunpack.c.l.b16 %v99
    %v1178 = vunpack.c.h.b16 %v99
    %v1179 = vunpack.c.l.b16 %v100
    %v1180 = vunpack.c.h.b16 %v100
    %v1181 = vunpack.c.l.b16 %v101
    %v1182 = vunpack.c.h.b16 %v101
    %v1183 = vunpack.c.l.b16 %v102
    %v1184 = vunpack.c.h.b16 %v102
    %v1185 = vunpack.c.l.b16 %v103
    %v1186 = vunpack.c.h.b16 %v103
    %v1187 = vunpack.c.l.b16 %v104
    %v1188 = vunpack.c.h.b16 %v104
    %v1189 = vunpack.c.l.b16 %v105
    %v1190 = vunpack.c.h.b16 %v105
    %v1191 = vunpack.c.l.b16 %v106
    %v1192 = vunpack.c.h.b16 %v106
    %v1193 = vunpack.c.l.b16 %v107
    %v1194 = vunpack.c.h.b16 %v107
    %v1195 = vunpack.c.l.b16 %v108
    %v1196 = vunpack.c.h.b16 %v108
    %v1197 = vunpack.c.l.b16 %v109
    %v1198 = vunpack.c.h.b16 %v109
    %v1199 = vpack.c.b16 %v1137, %v1135
    %v1200 = vpack.c.b16 %v1138, %v1136
    %v1201 = vpack.c.b16 %v1141, %v1139
    %v1202 = vpack.c.b16 %v1142, %v1140
    %v1203 = vpack.c.b16 %v1145, %v1143
    %v1204 = vpack.c.b16 %v1146, %v1144
    %v1205 = vpack.c.b16 %v1149, %v1147
    %v1206 = vpack.c.b16 %v1150, %v1148
    %v1207 = vpack.c.b16 %v1153, %v1151
    %v1208 = vpack.c.b16 %v1154, %v1152
    %v1209 = vpack.c.b16 %v1157, %v1155
    %v1210 = vpack.c.b16 %v1158, %v1156
    %v1211 = vpack.c.b16 %v1161, %v1159
    %v1212 = vpack.c.b16 %v1162, %v1160
    %v1213 = vpack.c.b16 %v1165, %v1163
    %v1214 = vpack.c.b16 %v1166, %v1164
    %v1215 = vpack.c.b16 %v1169, %v1167
    %v1216 = vpack.c.b16 %v1170, %v1168
    %v1217 = vpack.c.b16 %v1173, %v1171
    %v1218 = vpack.c.b16 %v1174, %v1172
    %v1219 = vpack.c.b16 %v1177, %v1175
    %v1220 = vpack.c.b16 %v1178, %v1176
    %v1221 = vpack.c.b16 %v1181, %v1179
    %v1222 = vpack.c.b16 %v1182, %v1180
    %v1223 = vpack.c.b16 %v1185, %v1183
    %v1224 = vpack.c.b16 %v1186, %v1184
    %v1225 = vpack.c.b16 %v1189, %v1187
    %v1226 = vpack.c.b16 %v1190, %v1188
    %v1227 = vpack.c.b16 %v1193, %v1191
    %v1228 = vpack.c.b16 %v1194, %v1192
    %v1229 = vpack.c.b16 %v1197, %v1195
    %v1230 = vpack.c.b16 %v1198, %v1196
    %1263 = vmatprep.subr.bf16.mxu0 0
    %1264 = vmatpush1.bf16.msra.mxu0 %v1080
    %1265 = vmatprep.subr.bf16.mxu0 0
    %1266 = vmatpush1.bf16.msra.mxu0 %v1081
    %1267 = vmatprep.subr.bf16.mxu0 0
    %1268 = vmatpush1.bf16.msra.mxu0 %v1082
    %1269 = vmatprep.subr.bf16.mxu0 0
    %1270 = vmatpush1.bf16.msra.mxu0 %v1083
    %1271 = vmatprep.subr.bf16.mxu0 0
    %1272 = vmatpush1.bf16.msra.mxu0 %v1084
    %1273 = vmatprep.subr.bf16.mxu0 0
    %1274 = vmatpush1.bf16.msra.mxu0 %v1085
    %1275 = vmatprep.subr.bf16.mxu0 0
    %1276 = vmatpush1.bf16.msra.mxu0 %v1086
    %1277 = vmatprep.subr.bf16.mxu0 0
    %1278 = vmatpush1.bf16.msra.mxu0 %v1087
    %1279 = vmatprep.subr.bf16.mxu0 0
    %1280 = vmatpush1.bf16.msra.mxu0 %v1088
    %1281 = vmatprep.subr.bf16.mxu0 0
    %1282 = vmatpush1.bf16.msra.mxu0 %v1089
    %1283 = vmatprep.subr.bf16.mxu0 0
    %1284 = vmatpush1.bf16.msra.mxu0 %v1090
    %1285 = vmatprep.subr.bf16.mxu0 0
    %1286 = vmatpush1.bf16.msra.mxu0 %v1091
    %1287 = vmatprep.subr.bf16.mxu0 0
    %1288 = vmatpush1.bf16.msra.mxu0 %v1092
    %1289 = vmatprep.subr.bf16.mxu0 0
    %1290 = vmatpush1.bf16.msra.mxu0 %v1093
    %1291 = vmatprep.subr.bf16.mxu0 0
    %1292 = vmatpush1.bf16.msra.mxu0 %v1094
    %1293 = vmatprep.subr.bf16.mxu0 0
    %1294 = vmatpush1.bf16.msra.mxu0 %v1095
    %1295 = vmatprep.mubr.bf16.mxu0 %v1200
    %1296 = vmatmul.mubr.bf16.gmra.mrb[0].mxu0 %v1199
    %v1297 = vpop.f32.mrb[0].mxu0
    %v1298 = vadd.f32 %v1101, %v1297
    %v1299 = vpop.f32.mrb[0].mxu0
    %v1300 = vpop.f32.mrb[0].mxu0
    %v1301 = vadd.f32 %v1101, %v1300
    %v1302 = vpop.f32.mrb[0].mxu0
    %1303 = vmatprep.mubr.bf16.mxu0 %v1202
    %1304 = vmatmul.mubr.bf16.gmra.mrb[0].mxu0 %v1201
    %v1305 = vpop.f32.mrb[0].mxu0
    %v1306 = vadd.f32 %v1101, %v1305
    %v1307 = vpop.f32.mrb[0].mxu0
    %v1308 = vpop.f32.mrb[0].mxu0
    %v1309 = vadd.f32 %v1101, %v1308
    %v1310 = vpop.f32.mrb[0].mxu0
    %1311 = vmatprep.mubr.bf16.mxu0 %v1204
    %1312 = vmatmul.mubr.bf16.gmra.mrb[0].mxu0 %v1203
    %v1313 = vpop.f32.mrb[0].mxu0
    %v1314 = vadd.f32 %v1101, %v1313
    %v1315 = vpop.f32.mrb[0].mxu0
    %v1316 = vpop.f32.mrb[0].mxu0
    %v1317 = vadd.f32 %v1101, %v1316
    %v1318 = vpop.f32.mrb[0].mxu0
    %1319 = vmatprep.mubr.bf16.mxu0 %v1206
    %1320 = vmatmul.mubr.bf16.gmra.mrb[0].mxu0 %v1205
    %v1321 = vpop.f32.mrb[0].mxu0
    %v1322 = vadd.f32 %v1101, %v1321
    %v1323 = vpop.f32.mrb[0].mxu0
    %v1324 = vpop.f32.mrb[0].mxu0
    %v1325 = vadd.f32 %v1101, %v1324
    %v1326 = vpop.f32.mrb[0].mxu0
    %1327 = vmatprep.mubr.bf16.mxu0 %v1208
    %1328 = vmatmul.mubr.bf16.gmra.mrb[0].mxu0 %v1207
    %v1329 = vpop.f32.mrb[0].mxu0
    %v1330 = vadd.f32 %v1101, %v1329
    %v1331 = vpop.f32.mrb[0].mxu0
    %v1332 = vpop.f32.mrb[0].mxu0
    %v1333 = vadd.f32 %v1101, %v1332
    %v1334 = vpop.f32.mrb[0].mxu0
    %1335 = vmatprep.mubr.bf16.mxu0 %v1210
    %1336 = vmatmul.mubr.bf16.gmra.mrb[0].mxu0 %v1209
    %v1337 = vpop.f32.mrb[0].mxu0
    %v1338 = vadd.f32 %v1101, %v1337
    %v1339 = vpop.f32.mrb[0].mxu0
    %v1340 = vpop.f32.mrb[0].mxu0
    %v1341 = vadd.f32 %v1101, %v1340
    %v1342 = vpop.f32.mrb[0].mxu0
    %1343 = vmatprep.mubr.bf16.mxu0 %v1212
    %1344 = vmatmul.mubr.bf16.gmra.mrb[0].mxu0 %v1211
    %v1345 = vpop.f32.mrb[0].mxu0
    %v1346 = vadd.f32 %v1101, %v1345
    %v1347 = vpop.f32.mrb[0].mxu0
    %v1348 = vpop.f32.mrb[0].mxu0
    %v1349 = vadd.f32 %v1101, %v1348
    %v1350 = vpop.f32.mrb[0].mxu0
    %1351 = vmatprep.mubr.bf16.mxu0 %v1214
    %1352 = vmatmul.mubr.bf16.gmra.mrb[0].mxu0 %v1213
    %v1353 = vpop.f32.mrb[0].mxu0
    %v1354 = vadd.f32 %v1101, %v1353
    %v1355 = vpop.f32.mrb[0].mxu0
    %v1356 = vpop.f32.mrb[0].mxu0
    %v1357 = vadd.f32 %v1101, %v1356
    %v1358 = vpop.f32.mrb[0].mxu0
    %1359 = vmatprep.mubr.bf16.mxu0 %v1216
    %1360 = vmatmul.mubr.bf16.gmra.mrb[0].mxu0 %v1215
    %v1361 = vpop.f32.mrb[0].mxu0
    %v1362 = vadd.f32 %v1101, %v1361
    %v1363 = vpop.f32.mrb[0].mxu0
    %v1364 = vpop.f32.mrb[0].mxu0
    %v1365 = vadd.f32 %v1101, %v1364
    %v1366 = vpop.f32.mrb[0].mxu0
    %1367 = vmatprep.mubr.bf16.mxu0 %v1218
    %1368 = vmatmul.mubr.bf16.gmra.mrb[0].mxu0 %v1217
    %v1369 = vpop.f32.mrb[0].mxu0
    %v1370 = vadd.f32 %v1101, %v1369
    %v1371 = vpop.f32.mrb[0].mxu0
    %v1372 = vpop.f32.mrb[0].mxu0
    %v1373 = vadd.f32 %v1101, %v1372
    %v1374 = vpop.f32.mrb[0].mxu0
    %1375 = vmatprep.mubr.bf16.mxu0 %v1220
    %1376 = vmatmul.mubr.bf16.gmra.mrb[0].mxu0 %v1219
    %v1377 = vpop.f32.mrb[0].mxu0
    %v1378 = vadd.f32 %v1101, %v1377
    %v1379 = vpop.f32.mrb[0].mxu0
    %v1380 = vpop.f32.mrb[0].mxu0
    %v1381 = vadd.f32 %v1101, %v1380
    %v1382 = vpop.f32.mrb[0].mxu0
    %1383 = vmatprep.mubr.bf16.mxu0 %v1222
    %1384 = vmatmul.mubr.bf16.gmra.mrb[0].mxu0 %v1221
    %v1385 = vpop.f32.mrb[0].mxu0
    %v1386 = vadd.f32 %v1101, %v1385
    %v1387 = vpop.f32.mrb[0].mxu0
    %v1388 = vpop.f32.mrb[0].mxu0
    %v1389 = vadd.f32 %v1101, %v1388
    %v1390 = vpop.f32.mrb[0].mxu0
    %1391 = vmatprep.mubr.bf16.mxu0 %v1224
    %1392 = vmatmul.mubr.bf16.gmra.mrb[0].mxu0 %v1223
    %v1393 = vpop.f32.mrb[0].mxu0
    %v1394 = vadd.f32 %v1101, %v1393
    %v1395 = vpop.f32.mrb[0].mxu0
    %v1396 = vpop.f32.mrb[0].mxu0
    %v1397 = vadd.f32 %v1101, %v1396
    %v1398 = vpop.f32.mrb[0].mxu0
    %1399 = vmatprep.mubr.bf16.mxu0 %v1226
    %1400 = vmatmul.mubr.bf16.gmra.mrb[0].mxu0 %v1225
    %v1401 = vpop.f32.mrb[0].mxu0
    %v1402 = vadd.f32 %v1101, %v1401
    %v1403 = vpop.f32.mrb[0].mxu0
    %v1404 = vpop.f32.mrb[0].mxu0
    %v1405 = vadd.f32 %v1101, %v1404
    %v1406 = vpop.f32.mrb[0].mxu0
    %1407 = vmatprep.mubr.bf16.mxu0 %v1228
    %1408 = vmatmul.mubr.bf16.gmra.mrb[0].mxu0 %v1227
    %v1409 = vpop.f32.mrb[0].mxu0
    %v1410 = vadd.f32 %v1101, %v1409
    %v1411 = vpop.f32.mrb[0].mxu0
    %v1412 = vpop.f32.mrb[0].mxu0
    %v1413 = vadd.f32 %v1101, %v1412
    %v1414 = vpop.f32.mrb[0].mxu0
    %1415 = vmatprep.mubr.bf16.mxu0 %v1230
    %1416 = vmatmul.mubr.bf16.gmra.mrb[0].mxu0 %v1229
    %v1417 = vpop.f32.mrb[0].mxu0
    %v1418 = vadd.f32 %v1101, %v1417
    %v1419 = vpop.f32.mrb[0].mxu0
    %v1420 = vpop.f32.mrb[0].mxu0
    %v1421 = vadd.f32 %v1101, %v1420
    %v1422 = vpop.f32.mrb[0].mxu0
    %1423 = vdwg.mxu0
    %v1424 = vmax.f32 %v1298, 0.0
    %v1425 = vmax.f32 %v1301, 0.0
    %v1426 = vmax.f32 %v1306, 0.0
    %v1427 = vmax.f32 %v1309, 0.0
    %v1428 = vmax.f32 %v1314, 0.0
    %v1429 = vmax.f32 %v1317, 0.0
    %v1430 = vmax.f32 %v1322, 0.0
    %v1431 = vmax.f32 %v1325, 0.0
    %v1432 = vmax.f32 %v1330, 0.0
    %v1433 = vmax.f32 %v1333, 0.0
    %v1434 = vmax.f32 %v1338, 0.0
    %v1435 = vmax.f32 %v1341, 0.0
    %v1436 = vmax.f32 %v1346, 0.0
    %v1437 = vmax.f32 %v1349, 0.0
    %v1438 = vmax.f32 %v1354, 0.0
    %v1439 = vmax.f32 %v1357, 0.0
    %v1440 = vmax.f32 %v1362, 0.0
    %v1441 = vmax.f32 %v1365, 0.0
    %v1442 = vmax.f32 %v1370, 0.0
    %v1443 = vmax.f32 %v1373, 0.0
    %v1444 = vmax.f32 %v1378, 0.0
    %v1445 = vmax.f32 %v1381, 0.0
    %v1446 = vmax.f32 %v1386, 0.0
    %v1447 = vmax.f32 %v1389, 0.0
    %v1448 = vmax.f32 %v1394, 0.0
    %v1449 = vmax.f32 %v1397, 0.0
    %v1450 = vmax.f32 %v1402, 0.0
    %v1451 = vmax.f32 %v1405, 0.0
    %v1452 = vmax.f32 %v1410, 0.0
    %v1453 = vmax.f32 %v1413, 0.0
    %v1454 = vmax.f32 %v1418, 0.0
    %v1455 = vmax.f32 %v1421, 0.0
    %v1456 = vpack.c.bf16 %v1425, %v1424
    %v1457 = vpack.c.bf16 %v1427, %v1426
    %v1458 = vpack.c.bf16 %v1429, %v1428
    %v1459 = vpack.c.bf16 %v1431, %v1430
    %v1460 = vpack.c.bf16 %v1433, %v1432
    %v1461 = vpack.c.bf16 %v1435, %v1434
    %v1462 = vpack.c.bf16 %v1437, %v1436
    %v1463 = vpack.c.bf16 %v1439, %v1438
    %v1464 = vpack.c.bf16 %v1441, %v1440
    %v1465 = vpack.c.bf16 %v1443, %v1442
    %v1466 = vpack.c.bf16 %v1445, %v1444
    %v1467 = vpack.c.bf16 %v1447, %v1446
    %v1468 = vpack.c.bf16 %v1449, %v1448
    %v1469 = vpack.c.bf16 %v1451, %v1450
    %v1470 = vpack.c.bf16 %v1453, %v1452
    %v1471 = vpack.c.bf16 %v1455, %v1454
    %v1472 = vld [vmem:[%s7] sm:$0xf]
    %v1473 = vld [vmem:[%s7 + $0x4] sm:$0xf]
    %v1474 = vld [vmem:[%s7 + $0x8] sm:$0xf]
    %v1475 = vld [vmem:[%s7 + $0xc] sm:$0xf]
    %v1476 = vld [vmem:[%s7 + $0x10] sm:$0xf]
    %v1477 = vld [vmem:[%s7 + $0x14] sm:$0xf]
    %v1478 = vld [vmem:[%s7 + $0x18] sm:$0xf]
    %v1479 = vld [vmem:[%s7 + $0x1c] sm:$0xf]
    %v1480 = vld [vmem:[%s7 + $0x20] sm:$0xf]
    %v1481 = vld [vmem:[%s7 + $0x24] sm:$0xf]
    %v1482 = vld [vmem:[%s7 + $0x28] sm:$0xf]
    %v1483 = vld [vmem:[%s7 + $0x2c] sm:$0xf]
    %v1484 = vld [vmem:[%s7 + $0x30] sm:$0xf]
    %v1485 = vld [vmem:[%s7 + $0x34] sm:$0xf]
    %v1486 = vld [vmem:[%s7 + $0x38] sm:$0xf]
    %v1487 = vld [vmem:[%s7 + $0x3c] sm:$0xf]
    %v1504 = vunpack.c.l.b16 %v1472
    %v1505 = vunpack.c.l.b16 %v1473
    %v1506 = vunpack.c.l.b16 %v1474
    %v1507 = vunpack.c.l.b16 %v1475
    %v1508 = vunpack.c.l.b16 %v1476
    %v1509 = vunpack.c.l.b16 %v1477
    %v1510 = vunpack.c.l.b16 %v1478
    %v1511 = vunpack.c.l.b16 %v1479
    %v1512 = vunpack.c.l.b16 %v1480
    %v1513 = vunpack.c.l.b16 %v1481
    %v1514 = vunpack.c.l.b16 %v1482
    %v1515 = vunpack.c.l.b16 %v1483
    %v1516 = vunpack.c.l.b16 %v1484
    %v1517 = vunpack.c.l.b16 %v1485
    %v1518 = vunpack.c.l.b16 %v1486
    %v1519 = vunpack.c.l.b16 %v1487
    %v1520 = vpack.c.b16 %v1505, %v1504
    %v1521 = vpack.c.b16 %v1507, %v1506
    %v1522 = vpack.c.b16 %v1509, %v1508
    %v1523 = vpack.c.b16 %v1511, %v1510
    %v1524 = vpack.c.b16 %v1513, %v1512
    %v1525 = vpack.c.b16 %v1515, %v1514
    %v1526 = vpack.c.b16 %v1517, %v1516
    %v1527 = vpack.c.b16 %v1519, %v1518
    %1536 = vmatprep.subr.bf16.mxu0 0
    %1537 = vmatpush1.bf16.msra.mxu0 %v1520
    %1538 = vmatprep.subr.bf16.mxu0 0
    %1539 = vmatpush1.bf16.msra.mxu0 %v1521
    %1540 = vmatprep.subr.bf16.mxu0 0
    %1541 = vmatpush1.bf16.msra.mxu0 %v1522
    %1542 = vmatprep.subr.bf16.mxu0 0
    %1543 = vmatpush1.bf16.msra.mxu0 %v1523
    %1544 = vmatprep.subr.bf16.mxu0 0
    %1545 = vmatpush1.bf16.msra.mxu0 %v1524
    %1546 = vmatprep.subr.bf16.mxu0 0
    %1547 = vmatpush1.bf16.msra.mxu0 %v1525
    %1548 = vmatprep.subr.bf16.mxu0 0
    %1549 = vmatpush1.bf16.msra.mxu0 %v1526
    %1550 = vmatprep.subr.bf16.mxu0 0
    %1551 = vmatpush1.bf16.msra.mxu0 %v1527
    %1552 = vmatprep.subr.bf16.mxu0 0
    %1553 = vmatpush1.bf16.msra.mxu0 0
    %1554 = vmatprep.subr.bf16.mxu0 0
    %1555 = vmatpush1.bf16.msra.mxu0 0
    %1556 = vmatprep.subr.bf16.mxu0 0
    %1557 = vmatpush1.bf16.msra.mxu0 0
    %1558 = vmatprep.subr.bf16.mxu0 0
    %1559 = vmatpush1.bf16.msra.mxu0 0
    %1560 = vmatprep.subr.bf16.mxu0 0
    %1561 = vmatpush1.bf16.msra.mxu0 0
    %1562 = vmatprep.subr.bf16.mxu0 0
    %1563 = vmatpush1.bf16.msra.mxu0 0
    %1564 = vmatprep.subr.bf16.mxu0 0
    %1565 = vmatpush1.bf16.msra.mxu0 0
    %1566 = vmatprep.subr.bf16.mxu0 0
    %1567 = vmatpush1.bf16.msra.mxu0 0
    %1568 = vmatprep.mubr.bf16.mxu0 0
    %1569 = vmatmul.mubr.bf16.gmra.mrb[0].mxu0 %v1456
    %v1570 = vpop.f32.mrb[0].mxu0
    %v1571 = vadd.f32 0.0, %v1570
    %v1572 = vpop.f32.mrb[0].mxu0
    %v1573 = vpop.f32.mrb[0].mxu0
    %v1574 = vadd.f32 0.0, %v1573
    %v1575 = vpop.f32.mrb[0].mxu0
    %1576 = vmatprep.mubr.bf16.mxu0 0
    %1577 = vmatmul.mubr.bf16.gmra.mrb[0].mxu0 %v1457
    %v1578 = vpop.f32.mrb[0].mxu0
    %v1579 = vadd.f32 0.0, %v1578
    %v1580 = vpop.f32.mrb[0].mxu0
    %v1581 = vpop.f32.mrb[0].mxu0
    %v1582 = vadd.f32 0.0, %v1581
    %v1583 = vpop.f32.mrb[0].mxu0
    %1584 = vmatprep.mubr.bf16.mxu0 0
    %1585 = vmatmul.mubr.bf16.gmra.mrb[0].mxu0 %v1458
    %v1586 = vpop.f32.mrb[0].mxu0
    %v1587 = vadd.f32 0.0, %v1586
    %v1588 = vpop.f32.mrb[0].mxu0
    %v1589 = vpop.f32.mrb[0].mxu0
    %v1590 = vadd.f32 0.0, %v1589
    %v1591 = vpop.f32.mrb[0].mxu0
    %1592 = vmatprep.mubr.bf16.mxu0 0
    %1593 = vmatmul.mubr.bf16.gmra.mrb[0].mxu0 %v1459
    %v1594 = vpop.f32.mrb[0].mxu0
    %v1595 = vadd.f32 0.0, %v1594
    %v1596 = vpop.f32.mrb[0].mxu0
    %v1597 = vpop.f32.mrb[0].mxu0
    %v1598 = vadd.f32 0.0, %v1597
    %v1599 = vpop.f32.mrb[0].mxu0
    %1600 = vmatprep.mubr.bf16.mxu0 0
    %1601 = vmatmul.mubr.bf16.gmra.mrb[0].mxu0 %v1460
    %v1602 = vpop.f32.mrb[0].mxu0
    %v1603 = vadd.f32 0.0, %v1602
    %v1604 = vpop.f32.mrb[0].mxu0
    %v1605 = vpop.f32.mrb[0].mxu0
    %v1606 = vadd.f32 0.0, %v1605
    %v1607 = vpop.f32.mrb[0].mxu0
    %1608 = vmatprep.mubr.bf16.mxu0 0
    %1609 = vmatmul.mubr.bf16.gmra.mrb[0].mxu0 %v1461
    %v1610 = vpop.f32.mrb[0].mxu0
    %v1611 = vadd.f32 0.0, %v1610
    %v1612 = vpop.f32.mrb[0].mxu0
    %v1613 = vpop.f32.mrb[0].mxu0
    %v1614 = vadd.f32 0.0, %v1613
    %v1615 = vpop.f32.mrb[0].mxu0
    %1616 = vmatprep.mubr.bf16.mxu0 0
    %1617 = vmatmul.mubr.bf16.gmra.mrb[0].mxu0 %v1462
    %v1618 = vpop.f32.mrb[0].mxu0
    %v1619 = vadd.f32 0.0, %v1618
    %v1620 = vpop.f32.mrb[0].mxu0
    %v1621 = vpop.f32.mrb[0].mxu0
    %v1622 = vadd.f32 0.0, %v1621
    %v1623 = vpop.f32.mrb[0].mxu0
    %1624 = vmatprep.mubr.bf16.mxu0 0
    %1625 = vmatmul.mubr.bf16.gmra.mrb[0].mxu0 %v1463
    %v1626 = vpop.f32.mrb[0].mxu0
    %v1627 = vadd.f32 0.0, %v1626
    %v1628 = vpop.f32.mrb[0].mxu0
    %v1629 = vpop.f32.mrb[0].mxu0
    %v1630 = vadd.f32 0.0, %v1629
    %v1631 = vpop.f32.mrb[0].mxu0
    %1632 = vmatprep.mubr.bf16.mxu0 0
    %1633 = vmatmul.mubr.bf16.gmra.mrb[0].mxu0 %v1464
    %v1634 = vpop.f32.mrb[0].mxu0
    %v1635 = vadd.f32 0.0, %v1634
    %v1636 = vpop.f32.mrb[0].mxu0
    %v1637 = vpop.f32.mrb[0].mxu0
    %v1638 = vadd.f32 0.0, %v1637
    %v1639 = vpop.f32.mrb[0].mxu0
    %1640 = vmatprep.mubr.bf16.mxu0 0
    %1641 = vmatmul.mubr.bf16.gmra.mrb[0].mxu0 %v1465
    %v1642 = vpop.f32.mrb[0].mxu0
    %v1643 = vadd.f32 0.0, %v1642
    %v1644 = vpop.f32.mrb[0].mxu0
    %v1645 = vpop.f32.mrb[0].mxu0
    %v1646 = vadd.f32 0.0, %v1645
    %v1647 = vpop.f32.mrb[0].mxu0
    %1648 = vmatprep.mubr.bf16.mxu0 0
    %1649 = vmatmul.mubr.bf16.gmra.mrb[0].mxu0 %v1466
    %v1650 = vpop.f32.mrb[0].mxu0
    %v1651 = vadd.f32 0.0, %v1650
    %v1652 = vpop.f32.mrb[0].mxu0
    %v1653 = vpop.f32.mrb[0].mxu0
    %v1654 = vadd.f32 0.0, %v1653
    %v1655 = vpop.f32.mrb[0].mxu0
    %1656 = vmatprep.mubr.bf16.mxu0 0
    %1657 = vmatmul.mubr.bf16.gmra.mrb[0].mxu0 %v1467
    %v1658 = vpop.f32.mrb[0].mxu0
    %v1659 = vadd.f32 0.0, %v1658
    %v1660 = vpop.f32.mrb[0].mxu0
    %v1661 = vpop.f32.mrb[0].mxu0
    %v1662 = vadd.f32 0.0, %v1661
    %v1663 = vpop.f32.mrb[0].mxu0
    %1664 = vmatprep.mubr.bf16.mxu0 0
    %1665 = vmatmul.mubr.bf16.gmra.mrb[0].mxu0 %v1468
    %v1666 = vpop.f32.mrb[0].mxu0
    %v1667 = vadd.f32 0.0, %v1666
    %v1668 = vpop.f32.mrb[0].mxu0
    %v1669 = vpop.f32.mrb[0].mxu0
    %v1670 = vadd.f32 0.0, %v1669
    %v1671 = vpop.f32.mrb[0].mxu0
    %1672 = vmatprep.mubr.bf16.mxu0 0
    %1673 = vmatmul.mubr.bf16.gmra.mrb[0].mxu0 %v1469
    %v1674 = vpop.f32.mrb[0].mxu0
    %v1675 = vadd.f32 0.0, %v1674
    %v1676 = vpop.f32.mrb[0].mxu0
    %v1677 = vpop.f32.mrb[0].mxu0
    %v1678 = vadd.f32 0.0, %v1677
    %v1679 = vpop.f32.mrb[0].mxu0
    %1680 = vmatprep.mubr.bf16.mxu0 0
    %1681 = vmatmul.mubr.bf16.gmra.mrb[0].mxu0 %v1470
    %v1682 = vpop.f32.mrb[0].mxu0
    %v1683 = vadd.f32 0.0, %v1682
    %v1684 = vpop.f32.mrb[0].mxu0
    %v1685 = vpop.f32.mrb[0].mxu0
    %v1686 = vadd.f32 0.0, %v1685
    %v1687 = vpop.f32.mrb[0].mxu0
    %1688 = vmatprep.mubr.bf16.mxu0 0
    %1689 = vmatmul.mubr.bf16.gmra.mrb[0].mxu0 %v1471
    %v1690 = vpop.f32.mrb[0].mxu0
    %v1691 = vadd.f32 0.0, %v1690
    %v1692 = vpop.f32.mrb[0].mxu0
    %v1693 = vpop.f32.mrb[0].mxu0
    %v1694 = vadd.f32 0.0, %v1693
    %v1695 = vpop.f32.mrb[0].mxu0
    %1696 = vdwg.mxu0
    %v1697 = vpack.c.bf16 %v1574, %v1571
    %v1698 = vpack.c.bf16 %v1582, %v1579
    %v1699 = vpack.c.bf16 %v1590, %v1587
    %v1700 = vpack.c.bf16 %v1598, %v1595
    %v1701 = vpack.c.bf16 %v1606, %v1603
    %v1702 = vpack.c.bf16 %v1614, %v1611
    %v1703 = vpack.c.bf16 %v1622, %v1619
    %v1704 = vpack.c.bf16 %v1630, %v1627
    %v1705 = vpack.c.bf16 %v1638, %v1635
    %v1706 = vpack.c.bf16 %v1646, %v1643
    %v1707 = vpack.c.bf16 %v1654, %v1651
    %v1708 = vpack.c.bf16 %v1662, %v1659
    %v1709 = vpack.c.bf16 %v1670, %v1667
    %v1710 = vpack.c.bf16 %v1678, %v1675
    %v1711 = vpack.c.bf16 %v1686, %v1683
    %v1712 = vpack.c.bf16 %v1694, %v1691
    %v1713 = vld [vmem:[%s8] sm:$0x1]
    %v1715 = vlaneseq
    %v1716 = vshrl.u32 %v1715, 7
    %v1717 = vsub.s32 0, %v1716
    %v1718 = vrot.slane %v1713, %v1717
    %1720 = vmatprep.subr.bf16.mxu0 0
    %1721 = vmatpush1.bf16.msra.mxu0 %v1697
    %1722 = vmatprep.subr.bf16.mxu0 0
    %1723 = vmatpush1.bf16.msra.mxu0 %v1698
    %1724 = vmatprep.subr.bf16.mxu0 0
    %1725 = vmatpush1.bf16.msra.mxu0 %v1699
    %1726 = vmatprep.subr.bf16.mxu0 0
    %1727 = vmatpush1.bf16.msra.mxu0 %v1700
    %1728 = vmatprep.subr.bf16.mxu0 0
    %1729 = vmatpush1.bf16.msra.mxu0 %v1701
    %1730 = vmatprep.subr.bf16.mxu0 0
    %1731 = vmatpush1.bf16.msra.mxu0 %v1702
    %1732 = vmatprep.subr.bf16.mxu0 0
    %1733 = vmatpush1.bf16.msra.mxu0 %v1703
    %1734 = vmatprep.subr.bf16.mxu0 0
    %1735 = vmatpush1.bf16.msra.mxu0 %v1704
    %1736 = vmatprep.subr.bf16.mxu0 0
    %1737 = vmatpush1.bf16.msra.mxu0 %v1705
    %1738 = vmatprep.subr.bf16.mxu0 0
    %1739 = vmatpush1.bf16.msra.mxu0 %v1706
    %1740 = vmatprep.subr.bf16.mxu0 0
    %1741 = vmatpush1.bf16.msra.mxu0 %v1707
    %1742 = vmatprep.subr.bf16.mxu0 0
    %1743 = vmatpush1.bf16.msra.mxu0 %v1708
    %1744 = vmatprep.subr.bf16.mxu0 0
    %1745 = vmatpush1.bf16.msra.mxu0 %v1709
    %1746 = vmatprep.subr.bf16.mxu0 0
    %1747 = vmatpush1.bf16.msra.mxu0 %v1710
    %1748 = vmatprep.subr.bf16.mxu0 0
    %1749 = vmatpush1.bf16.msra.mxu0 %v1711
    %1750 = vmatprep.subr.bf16.mxu0 0
    %1751 = vmatpush1.bf16.msra.mxu0 %v1712
    %1752 = vmatprep.mubr.bf16.mxu0 %v583
    %1753 = vmatmul.mubr.bf16.gmra.mrb[0].mxu0 %v582
    %v1754 = vpop.f32.mrb[0].mxu0
    %v1755 = vadd.f32 %v1718, %v1754
    %v1756 = vpop.f32.mrb[0].mxu0
    %v1757 = vpop.f32.mrb[0].mxu0
    %v1758 = vadd.f32 %v1718, %v1757
    %v1759 = vpop.f32.mrb[0].mxu0
    %1760 = vmatprep.mubr.bf16.mxu0 %v585
    %1761 = vmatmul.mubr.bf16.gmra.mrb[0].mxu0 %v584
    %v1762 = vpop.f32.mrb[0].mxu0
    %v1763 = vadd.f32 %v1718, %v1762
    %v1764 = vpop.f32.mrb[0].mxu0
    %v1765 = vpop.f32.mrb[0].mxu0
    %v1766 = vadd.f32 %v1718, %v1765
    %v1767 = vpop.f32.mrb[0].mxu0
    %1768 = vmatprep.mubr.bf16.mxu0 %v587
    %1769 = vmatmul.mubr.bf16.gmra.mrb[0].mxu0 %v586
    %v1770 = vpop.f32.mrb[0].mxu0
    %v1771 = vadd.f32 %v1718, %v1770
    %v1772 = vpop.f32.mrb[0].mxu0
    %v1773 = vpop.f32.mrb[0].mxu0
    %v1774 = vadd.f32 %v1718, %v1773
    %v1775 = vpop.f32.mrb[0].mxu0
    %1776 = vmatprep.mubr.bf16.mxu0 %v589
    %1777 = vmatmul.mubr.bf16.gmra.mrb[0].mxu0 %v588
    %v1778 = vpop.f32.mrb[0].mxu0
    %v1779 = vadd.f32 %v1718, %v1778
    %v1780 = vpop.f32.mrb[0].mxu0
    %v1781 = vpop.f32.mrb[0].mxu0
    %v1782 = vadd.f32 %v1718, %v1781
    %v1783 = vpop.f32.mrb[0].mxu0
    %1784 = vmatprep.mubr.bf16.mxu0 %v591
    %1785 = vmatmul.mubr.bf16.gmra.mrb[0].mxu0 %v590
    %v1786 = vpop.f32.mrb[0].mxu0
    %v1787 = vadd.f32 %v1718, %v1786
    %v1788 = vpop.f32.mrb[0].mxu0
    %v1789 = vpop.f32.mrb[0].mxu0
    %v1790 = vadd.f32 %v1718, %v1789
    %v1791 = vpop.f32.mrb[0].mxu0
    %1792 = vmatprep.mubr.bf16.mxu0 %v593
    %1793 = vmatmul.mubr.bf16.gmra.mrb[0].mxu0 %v592
    %v1794 = vpop.f32.mrb[0].mxu0
    %v1795 = vadd.f32 %v1718, %v1794
    %v1796 = vpop.f32.mrb[0].mxu0
    %v1797 = vpop.f32.mrb[0].mxu0
    %v1798 = vadd.f32 %v1718, %v1797
    %v1799 = vpop.f32.mrb[0].mxu0
    %1800 = vmatprep.mubr.bf16.mxu0 %v595
    %1801 = vmatmul.mubr.bf16.gmra.mrb[0].mxu0 %v594
    %v1802 = vpop.f32.mrb[0].mxu0
    %v1803 = vadd.f32 %v1718, %v1802
    %v1804 = vpop.f32.mrb[0].mxu0
    %v1805 = vpop.f32.mrb[0].mxu0
    %v1806 = vadd.f32 %v1718, %v1805
    %v1807 = vpop.f32.mrb[0].mxu0
    %1808 = vmatprep.mubr.bf16.mxu0 %v597
    %1809 = vmatmul.mubr.bf16.gmra.mrb[0].mxu0 %v596
    %v1810 = vpop.f32.mrb[0].mxu0
    %v1811 = vadd.f32 %v1718, %v1810
    %v1812 = vpop.f32.mrb[0].mxu0
    %v1813 = vpop.f32.mrb[0].mxu0
    %v1814 = vadd.f32 %v1718, %v1813
    %v1815 = vpop.f32.mrb[0].mxu0
    %1816 = vmatprep.mubr.bf16.mxu0 %v599
    %1817 = vmatmul.mubr.bf16.gmra.mrb[0].mxu0 %v598
    %v1818 = vpop.f32.mrb[0].mxu0
    %v1819 = vadd.f32 %v1718, %v1818
    %v1820 = vpop.f32.mrb[0].mxu0
    %v1821 = vpop.f32.mrb[0].mxu0
    %v1822 = vadd.f32 %v1718, %v1821
    %v1823 = vpop.f32.mrb[0].mxu0
    %1824 = vmatprep.mubr.bf16.mxu0 %v601
    %1825 = vmatmul.mubr.bf16.gmra.mrb[0].mxu0 %v600
    %v1826 = vpop.f32.mrb[0].mxu0
    %v1827 = vadd.f32 %v1718, %v1826
    %v1828 = vpop.f32.mrb[0].mxu0
    %v1829 = vpop.f32.mrb[0].mxu0
    %v1830 = vadd.f32 %v1718, %v1829
    %v1831 = vpop.f32.mrb[0].mxu0
    %1832 = vmatprep.mubr.bf16.mxu0 %v603
    %1833 = vmatmul.mubr.bf16.gmra.mrb[0].mxu0 %v602
    %v1834 = vpop.f32.mrb[0].mxu0
    %v1835 = vadd.f32 %v1718, %v1834
    %v1836 = vpop.f32.mrb[0].mxu0
    %v1837 = vpop.f32.mrb[0].mxu0
    %v1838 = vadd.f32 %v1718, %v1837
    %v1839 = vpop.f32.mrb[0].mxu0
    %1840 = vmatprep.mubr.bf16.mxu0 %v605
    %1841 = vmatmul.mubr.bf16.gmra.mrb[0].mxu0 %v604
    %v1842 = vpop.f32.mrb[0].mxu0
    %v1843 = vadd.f32 %v1718, %v1842
    %v1844 = vpop.f32.mrb[0].mxu0
    %v1845 = vpop.f32.mrb[0].mxu0
    %v1846 = vadd.f32 %v1718, %v1845
    %v1847 = vpop.f32.mrb[0].mxu0
    %1848 = vmatprep.mubr.bf16.mxu0 %v607
    %1849 = vmatmul.mubr.bf16.gmra.mrb[0].mxu0 %v606
    %v1850 = vpop.f32.mrb[0].mxu0
    %v1851 = vadd.f32 %v1718, %v1850
    %v1852 = vpop.f32.mrb[0].mxu0
    %v1853 = vpop.f32.mrb[0].mxu0
    %v1854 = vadd.f32 %v1718, %v1853
    %v1855 = vpop.f32.mrb[0].mxu0
    %1856 = vmatprep.mubr.bf16.mxu0 %v609
    %1857 = vmatmul.mubr.bf16.gmra.mrb[0].mxu0 %v608
    %v1858 = vpop.f32.mrb[0].mxu0
    %v1859 = vadd.f32 %v1718, %v1858
    %v1860 = vpop.f32.mrb[0].mxu0
    %v1861 = vpop.f32.mrb[0].mxu0
    %v1862 = vadd.f32 %v1718, %v1861
    %v1863 = vpop.f32.mrb[0].mxu0
    %1864 = vmatprep.mubr.bf16.mxu0 %v611
    %1865 = vmatmul.mubr.bf16.gmra.mrb[0].mxu0 %v610
    %v1866 = vpop.f32.mrb[0].mxu0
    %v1867 = vadd.f32 %v1718, %v1866
    %v1868 = vpop.f32.mrb[0].mxu0
    %v1869 = vpop.f32.mrb[0].mxu0
    %v1870 = vadd.f32 %v1718, %v1869
    %v1871 = vpop.f32.mrb[0].mxu0
    %1872 = vmatprep.mubr.bf16.mxu0 %v613
    %1873 = vmatmul.mubr.bf16.gmra.mrb[0].mxu0 %v612
    %v1874 = vpop.f32.mrb[0].mxu0
    %v1875 = vadd.f32 %v1718, %v1874
    %v1876 = vpop.f32.mrb[0].mxu0
    %v1877 = vpop.f32.mrb[0].mxu0
    %v1878 = vadd.f32 %v1718, %v1877
    %v1879 = vpop.f32.mrb[0].mxu0
    %1880 = vdwg.mxu0
    %v1881 = vmax.f32 %v1755, 0.0
    %v1882 = vmax.f32 %v1758, 0.0
    %v1883 = vmax.f32 %v1763, 0.0
    %v1884 = vmax.f32 %v1766, 0.0
    %v1885 = vmax.f32 %v1771, 0.0
    %v1886 = vmax.f32 %v1774, 0.0
    %v1887 = vmax.f32 %v1779, 0.0
    %v1888 = vmax.f32 %v1782, 0.0
    %v1889 = vmax.f32 %v1787, 0.0
    %v1890 = vmax.f32 %v1790, 0.0
    %v1891 = vmax.f32 %v1795, 0.0
    %v1892 = vmax.f32 %v1798, 0.0
    %v1893 = vmax.f32 %v1803, 0.0
    %v1894 = vmax.f32 %v1806, 0.0
    %v1895 = vmax.f32 %v1811, 0.0
    %v1896 = vmax.f32 %v1814, 0.0
    %v1897 = vmax.f32 %v1819, 0.0
    %v1898 = vmax.f32 %v1822, 0.0
    %v1899 = vmax.f32 %v1827, 0.0
    %v1900 = vmax.f32 %v1830, 0.0
    %v1901 = vmax.f32 %v1835, 0.0
    %v1902 = vmax.f32 %v1838, 0.0
    %v1903 = vmax.f32 %v1843, 0.0
    %v1904 = vmax.f32 %v1846, 0.0
    %v1905 = vmax.f32 %v1851, 0.0
    %v1906 = vmax.f32 %v1854, 0.0
    %v1907 = vmax.f32 %v1859, 0.0
    %v1908 = vmax.f32 %v1862, 0.0
    %v1909 = vmax.f32 %v1867, 0.0
    %v1910 = vmax.f32 %v1870, 0.0
    %v1911 = vmax.f32 %v1875, 0.0
    %v1912 = vmax.f32 %v1878, 0.0
    %v1913 = vpack.c.bf16 %v1882, %v1881
    %v1914 = vpack.c.bf16 %v1884, %v1883
    %v1915 = vpack.c.bf16 %v1886, %v1885
    %v1916 = vpack.c.bf16 %v1888, %v1887
    %v1917 = vpack.c.bf16 %v1890, %v1889
    %v1918 = vpack.c.bf16 %v1892, %v1891
    %v1919 = vpack.c.bf16 %v1894, %v1893
    %v1920 = vpack.c.bf16 %v1896, %v1895
    %v1921 = vpack.c.bf16 %v1898, %v1897
    %v1922 = vpack.c.bf16 %v1900, %v1899
    %v1923 = vpack.c.bf16 %v1902, %v1901
    %v1924 = vpack.c.bf16 %v1904, %v1903
    %v1925 = vpack.c.bf16 %v1906, %v1905
    %v1926 = vpack.c.bf16 %v1908, %v1907
    %v1927 = vpack.c.bf16 %v1910, %v1909
    %v1928 = vpack.c.bf16 %v1912, %v1911
    %v1929 = vld [vmem:[%s9] sm:$0xf]
    %v1930 = vld [vmem:[%s9 + $0x4] sm:$0xf]
    %v1931 = vld [vmem:[%s9 + $0x8] sm:$0xf]
    %v1932 = vld [vmem:[%s9 + $0xc] sm:$0xf]
    %v1933 = vld [vmem:[%s9 + $0x10] sm:$0xf]
    %v1934 = vld [vmem:[%s9 + $0x14] sm:$0xf]
    %v1935 = vld [vmem:[%s9 + $0x18] sm:$0xf]
    %v1936 = vld [vmem:[%s9 + $0x1c] sm:$0xf]
    %v1937 = vld [vmem:[%s9 + $0x20] sm:$0xf]
    %v1938 = vld [vmem:[%s9 + $0x24] sm:$0xf]
    %v1939 = vld [vmem:[%s9 + $0x28] sm:$0xf]
    %v1940 = vld [vmem:[%s9 + $0x2c] sm:$0xf]
    %v1941 = vld [vmem:[%s9 + $0x30] sm:$0xf]
    %v1942 = vld [vmem:[%s9 + $0x34] sm:$0xf]
    %v1943 = vld [vmem:[%s9 + $0x38] sm:$0xf]
    %v1944 = vld [vmem:[%s9 + $0x3c] sm:$0xf]
    %v1961 = vunpack.c.l.b16 %v1929
    %v1962 = vunpack.c.l.b16 %v1930
    %v1963 = vunpack.c.l.b16 %v1931
    %v1964 = vunpack.c.l.b16 %v1932
    %v1965 = vunpack.c.l.b16 %v1933
    %v1966 = vunpack.c.l.b16 %v1934
    %v1967 = vunpack.c.l.b16 %v1935
    %v1968 = vunpack.c.l.b16 %v1936
    %v1969 = vunpack.c.l.b16 %v1937
    %v1970 = vunpack.c.l.b16 %v1938
    %v1971 = vunpack.c.l.b16 %v1939
    %v1972 = vunpack.c.l.b16 %v1940
    %v1973 = vunpack.c.l.b16 %v1941
    %v1974 = vunpack.c.l.b16 %v1942
    %v1975 = vunpack.c.l.b16 %v1943
    %v1976 = vunpack.c.l.b16 %v1944
    %v1977 = vpack.c.b16 %v1962, %v1961
    %v1978 = vpack.c.b16 %v1964, %v1963
    %v1979 = vpack.c.b16 %v1966, %v1965
    %v1980 = vpack.c.b16 %v1968, %v1967
    %v1981 = vpack.c.b16 %v1970, %v1969
    %v1982 = vpack.c.b16 %v1972, %v1971
    %v1983 = vpack.c.b16 %v1974, %v1973
    %v1984 = vpack.c.b16 %v1976, %v1975
    %1993 = vmatprep.subr.bf16.mxu0 0
    %1994 = vmatpush1.bf16.msra.mxu0 %v1977
    %1995 = vmatprep.subr.bf16.mxu0 0
    %1996 = vmatpush1.bf16.msra.mxu0 %v1978
    %1997 = vmatprep.subr.bf16.mxu0 0
    %1998 = vmatpush1.bf16.msra.mxu0 %v1979
    %1999 = vmatprep.subr.bf16.mxu0 0
    %2000 = vmatpush1.bf16.msra.mxu0 %v1980
    %2001 = vmatprep.subr.bf16.mxu0 0
    %2002 = vmatpush1.bf16.msra.mxu0 %v1981
    %2003 = vmatprep.subr.bf16.mxu0 0
    %2004 = vmatpush1.bf16.msra.mxu0 %v1982
    %2005 = vmatprep.subr.bf16.mxu0 0
    %2006 = vmatpush1.bf16.msra.mxu0 %v1983
    %2007 = vmatprep.subr.bf16.mxu0 0
    %2008 = vmatpush1.bf16.msra.mxu0 %v1984
    %2009 = vmatprep.subr.bf16.mxu0 0
    %2010 = vmatpush1.bf16.msra.mxu0 0
    %2011 = vmatprep.subr.bf16.mxu0 0
    %2012 = vmatpush1.bf16.msra.mxu0 0
    %2013 = vmatprep.subr.bf16.mxu0 0
    %2014 = vmatpush1.bf16.msra.mxu0 0
    %2015 = vmatprep.subr.bf16.mxu0 0
    %2016 = vmatpush1.bf16.msra.mxu0 0
    %2017 = vmatprep.subr.bf16.mxu0 0
    %2018 = vmatpush1.bf16.msra.mxu0 0
    %2019 = vmatprep.subr.bf16.mxu0 0
    %2020 = vmatpush1.bf16.msra.mxu0 0
    %2021 = vmatprep.subr.bf16.mxu0 0
    %2022 = vmatpush1.bf16.msra.mxu0 0
    %2023 = vmatprep.subr.bf16.mxu0 0
    %2024 = vmatpush1.bf16.msra.mxu0 0
    %2025 = vmatprep.mubr.bf16.mxu0 0
    %2026 = vmatmul.mubr.bf16.gmra.mrb[0].mxu0 %v1913
    %v2027 = vpop.f32.mrb[0].mxu0
    %v2028 = vadd.f32 0.0, %v2027
    %v2029 = vpop.f32.mrb[0].mxu0
    %v2030 = vpop.f32.mrb[0].mxu0
    %v2031 = vadd.f32 0.0, %v2030
    %v2032 = vpop.f32.mrb[0].mxu0
    %2033 = vmatprep.mubr.bf16.mxu0 0
    %2034 = vmatmul.mubr.bf16.gmra.mrb[0].mxu0 %v1914
    %v2035 = vpop.f32.mrb[0].mxu0
    %v2036 = vadd.f32 0.0, %v2035
    %v2037 = vpop.f32.mrb[0].mxu0
    %v2038 = vpop.f32.mrb[0].mxu0
    %v2039 = vadd.f32 0.0, %v2038
    %v2040 = vpop.f32.mrb[0].mxu0
    %2041 = vmatprep.mubr.bf16.mxu0 0
    %2042 = vmatmul.mubr.bf16.gmra.mrb[0].mxu0 %v1915
    %v2043 = vpop.f32.mrb[0].mxu0
    %v2044 = vadd.f32 0.0, %v2043
    %v2045 = vpop.f32.mrb[0].mxu0
    %v2046 = vpop.f32.mrb[0].mxu0
    %v2047 = vadd.f32 0.0, %v2046
    %v2048 = vpop.f32.mrb[0].mxu0
    %2049 = vmatprep.mubr.bf16.mxu0 0
    %2050 = vmatmul.mubr.bf16.gmra.mrb[0].mxu0 %v1916
    %v2051 = vpop.f32.mrb[0].mxu0
    %v2052 = vadd.f32 0.0, %v2051
    %v2053 = vpop.f32.mrb[0].mxu0
    %v2054 = vpop.f32.mrb[0].mxu0
    %v2055 = vadd.f32 0.0, %v2054
    %v2056 = vpop.f32.mrb[0].mxu0
    %2057 = vmatprep.mubr.bf16.mxu0 0
    %2058 = vmatmul.mubr.bf16.gmra.mrb[0].mxu0 %v1917
    %v2059 = vpop.f32.mrb[0].mxu0
    %v2060 = vadd.f32 0.0, %v2059
    %v2061 = vpop.f32.mrb[0].mxu0
    %v2062 = vpop.f32.mrb[0].mxu0
    %v2063 = vadd.f32 0.0, %v2062
    %v2064 = vpop.f32.mrb[0].mxu0
    %2065 = vmatprep.mubr.bf16.mxu0 0
    %2066 = vmatmul.mubr.bf16.gmra.mrb[0].mxu0 %v1918
    %v2067 = vpop.f32.mrb[0].mxu0
    %v2068 = vadd.f32 0.0, %v2067
    %v2069 = vpop.f32.mrb[0].mxu0
    %v2070 = vpop.f32.mrb[0].mxu0
    %v2071 = vadd.f32 0.0, %v2070
    %v2072 = vpop.f32.mrb[0].mxu0
    %2073 = vmatprep.mubr.bf16.mxu0 0
    %2074 = vmatmul.mubr.bf16.gmra.mrb[0].mxu0 %v1919
    %v2075 = vpop.f32.mrb[0].mxu0
    %v2076 = vadd.f32 0.0, %v2075
    %v2077 = vpop.f32.mrb[0].mxu0
    %v2078 = vpop.f32.mrb[0].mxu0
    %v2079 = vadd.f32 0.0, %v2078
    %v2080 = vpop.f32.mrb[0].mxu0
    %2081 = vmatprep.mubr.bf16.mxu0 0
    %2082 = vmatmul.mubr.bf16.gmra.mrb[0].mxu0 %v1920
    %v2083 = vpop.f32.mrb[0].mxu0
    %v2084 = vadd.f32 0.0, %v2083
    %v2085 = vpop.f32.mrb[0].mxu0
    %v2086 = vpop.f32.mrb[0].mxu0
    %v2087 = vadd.f32 0.0, %v2086
    %v2088 = vpop.f32.mrb[0].mxu0
    %2089 = vmatprep.mubr.bf16.mxu0 0
    %2090 = vmatmul.mubr.bf16.gmra.mrb[0].mxu0 %v1921
    %v2091 = vpop.f32.mrb[0].mxu0
    %v2092 = vadd.f32 0.0, %v2091
    %v2093 = vpop.f32.mrb[0].mxu0
    %v2094 = vpop.f32.mrb[0].mxu0
    %v2095 = vadd.f32 0.0, %v2094
    %v2096 = vpop.f32.mrb[0].mxu0
    %2097 = vmatprep.mubr.bf16.mxu0 0
    %2098 = vmatmul.mubr.bf16.gmra.mrb[0].mxu0 %v1922
    %v2099 = vpop.f32.mrb[0].mxu0
    %v2100 = vadd.f32 0.0, %v2099
    %v2101 = vpop.f32.mrb[0].mxu0
    %v2102 = vpop.f32.mrb[0].mxu0
    %v2103 = vadd.f32 0.0, %v2102
    %v2104 = vpop.f32.mrb[0].mxu0
    %2105 = vmatprep.mubr.bf16.mxu0 0
    %2106 = vmatmul.mubr.bf16.gmra.mrb[0].mxu0 %v1923
    %v2107 = vpop.f32.mrb[0].mxu0
    %v2108 = vadd.f32 0.0, %v2107
    %v2109 = vpop.f32.mrb[0].mxu0
    %v2110 = vpop.f32.mrb[0].mxu0
    %v2111 = vadd.f32 0.0, %v2110
    %v2112 = vpop.f32.mrb[0].mxu0
    %2113 = vmatprep.mubr.bf16.mxu0 0
    %2114 = vmatmul.mubr.bf16.gmra.mrb[0].mxu0 %v1924
    %v2115 = vpop.f32.mrb[0].mxu0
    %v2116 = vadd.f32 0.0, %v2115
    %v2117 = vpop.f32.mrb[0].mxu0
    %v2118 = vpop.f32.mrb[0].mxu0
    %v2119 = vadd.f32 0.0, %v2118
    %v2120 = vpop.f32.mrb[0].mxu0
    %2121 = vmatprep.mubr.bf16.mxu0 0
    %2122 = vmatmul.mubr.bf16.gmra.mrb[0].mxu0 %v1925
    %v2123 = vpop.f32.mrb[0].mxu0
    %v2124 = vadd.f32 0.0, %v2123
    %v2125 = vpop.f32.mrb[0].mxu0
    %v2126 = vpop.f32.mrb[0].mxu0
    %v2127 = vadd.f32 0.0, %v2126
    %v2128 = vpop.f32.mrb[0].mxu0
    %2129 = vmatprep.mubr.bf16.mxu0 0
    %2130 = vmatmul.mubr.bf16.gmra.mrb[0].mxu0 %v1926
    %v2131 = vpop.f32.mrb[0].mxu0
    %v2132 = vadd.f32 0.0, %v2131
    %v2133 = vpop.f32.mrb[0].mxu0
    %v2134 = vpop.f32.mrb[0].mxu0
    %v2135 = vadd.f32 0.0, %v2134
    %v2136 = vpop.f32.mrb[0].mxu0
    %2137 = vmatprep.mubr.bf16.mxu0 0
    %2138 = vmatmul.mubr.bf16.gmra.mrb[0].mxu0 %v1927
    %v2139 = vpop.f32.mrb[0].mxu0
    %v2140 = vadd.f32 0.0, %v2139
    %v2141 = vpop.f32.mrb[0].mxu0
    %v2142 = vpop.f32.mrb[0].mxu0
    %v2143 = vadd.f32 0.0, %v2142
    %v2144 = vpop.f32.mrb[0].mxu0
    %2145 = vmatprep.mubr.bf16.mxu0 0
    %2146 = vmatmul.mubr.bf16.gmra.mrb[0].mxu0 %v1928
    %v2147 = vpop.f32.mrb[0].mxu0
    %v2148 = vadd.f32 0.0, %v2147
    %v2149 = vpop.f32.mrb[0].mxu0
    %v2150 = vpop.f32.mrb[0].mxu0
    %v2151 = vadd.f32 0.0, %v2150
    %v2152 = vpop.f32.mrb[0].mxu0
    %2153 = vdwg.mxu0
    %v2154 = vpack.c.bf16 %v2031, %v2028
    %v2155 = vpack.c.bf16 %v2039, %v2036
    %v2156 = vpack.c.bf16 %v2047, %v2044
    %v2157 = vpack.c.bf16 %v2055, %v2052
    %v2158 = vpack.c.bf16 %v2063, %v2060
    %v2159 = vpack.c.bf16 %v2071, %v2068
    %v2160 = vpack.c.bf16 %v2079, %v2076
    %v2161 = vpack.c.bf16 %v2087, %v2084
    %v2162 = vpack.c.bf16 %v2095, %v2092
    %v2163 = vpack.c.bf16 %v2103, %v2100
    %v2164 = vpack.c.bf16 %v2111, %v2108
    %v2165 = vpack.c.bf16 %v2119, %v2116
    %v2166 = vpack.c.bf16 %v2127, %v2124
    %v2167 = vpack.c.bf16 %v2135, %v2132
    %v2168 = vpack.c.bf16 %v2143, %v2140
    %v2169 = vpack.c.bf16 %v2151, %v2148
    %v2170 = vld [vmem:[%s10] sm:$0x1]
    %v2172 = vlaneseq
    %v2173 = vshrl.u32 %v2172, 7
    %v2174 = vsub.s32 0, %v2173
    %v2175 = vrot.slane %v2170, %v2174
    %2177 = vmatprep.subr.bf16.mxu0 0
    %2178 = vmatpush1.bf16.msra.mxu0 %v2154
    %2179 = vmatprep.subr.bf16.mxu0 0
    %2180 = vmatpush1.bf16.msra.mxu0 %v2155
    %2181 = vmatprep.subr.bf16.mxu0 0
    %2182 = vmatpush1.bf16.msra.mxu0 %v2156
    %2183 = vmatprep.subr.bf16.mxu0 0
    %2184 = vmatpush1.bf16.msra.mxu0 %v2157
    %2185 = vmatprep.subr.bf16.mxu0 0
    %2186 = vmatpush1.bf16.msra.mxu0 %v2158
    %2187 = vmatprep.subr.bf16.mxu0 0
    %2188 = vmatpush1.bf16.msra.mxu0 %v2159
    %2189 = vmatprep.subr.bf16.mxu0 0
    %2190 = vmatpush1.bf16.msra.mxu0 %v2160
    %2191 = vmatprep.subr.bf16.mxu0 0
    %2192 = vmatpush1.bf16.msra.mxu0 %v2161
    %2193 = vmatprep.subr.bf16.mxu0 0
    %2194 = vmatpush1.bf16.msra.mxu0 %v2162
    %2195 = vmatprep.subr.bf16.mxu0 0
    %2196 = vmatpush1.bf16.msra.mxu0 %v2163
    %2197 = vmatprep.subr.bf16.mxu0 0
    %2198 = vmatpush1.bf16.msra.mxu0 %v2164
    %2199 = vmatprep.subr.bf16.mxu0 0
    %2200 = vmatpush1.bf16.msra.mxu0 %v2165
    %2201 = vmatprep.subr.bf16.mxu0 0
    %2202 = vmatpush1.bf16.msra.mxu0 %v2166
    %2203 = vmatprep.subr.bf16.mxu0 0
    %2204 = vmatpush1.bf16.msra.mxu0 %v2167
    %2205 = vmatprep.subr.bf16.mxu0 0
    %2206 = vmatpush1.bf16.msra.mxu0 %v2168
    %2207 = vmatprep.subr.bf16.mxu0 0
    %2208 = vmatpush1.bf16.msra.mxu0 %v2169
    %2209 = vmatprep.mubr.bf16.mxu0 %v1200
    %2210 = vmatmul.mubr.bf16.gmra.mrb[0].mxu0 %v1199
    %v2211 = vpop.f32.mrb[0].mxu0
    %v2212 = vadd.f32 %v2175, %v2211
    %v2213 = vpop.f32.mrb[0].mxu0
    %v2214 = vpop.f32.mrb[0].mxu0
    %v2215 = vadd.f32 %v2175, %v2214
    %v2216 = vpop.f32.mrb[0].mxu0
    %2217 = vmatprep.mubr.bf16.mxu0 %v1202
    %2218 = vmatmul.mubr.bf16.gmra.mrb[0].mxu0 %v1201
    %v2219 = vpop.f32.mrb[0].mxu0
    %v2220 = vadd.f32 %v2175, %v2219
    %v2221 = vpop.f32.mrb[0].mxu0
    %v2222 = vpop.f32.mrb[0].mxu0
    %v2223 = vadd.f32 %v2175, %v2222
    %v2224 = vpop.f32.mrb[0].mxu0
    %2225 = vmatprep.mubr.bf16.mxu0 %v1204
    %2226 = vmatmul.mubr.bf16.gmra.mrb[0].mxu0 %v1203
    %v2227 = vpop.f32.mrb[0].mxu0
    %v2228 = vadd.f32 %v2175, %v2227
    %v2229 = vpop.f32.mrb[0].mxu0
    %v2230 = vpop.f32.mrb[0].mxu0
    %v2231 = vadd.f32 %v2175, %v2230
    %v2232 = vpop.f32.mrb[0].mxu0
    %2233 = vmatprep.mubr.bf16.mxu0 %v1206
    %2234 = vmatmul.mubr.bf16.gmra.mrb[0].mxu0 %v1205
    %v2235 = vpop.f32.mrb[0].mxu0
    %v2236 = vadd.f32 %v2175, %v2235
    %v2237 = vpop.f32.mrb[0].mxu0
    %v2238 = vpop.f32.mrb[0].mxu0
    %v2239 = vadd.f32 %v2175, %v2238
    %v2240 = vpop.f32.mrb[0].mxu0
    %2241 = vmatprep.mubr.bf16.mxu0 %v1208
    %2242 = vmatmul.mubr.bf16.gmra.mrb[0].mxu0 %v1207
    %v2243 = vpop.f32.mrb[0].mxu0
    %v2244 = vadd.f32 %v2175, %v2243
    %v2245 = vpop.f32.mrb[0].mxu0
    %v2246 = vpop.f32.mrb[0].mxu0
    %v2247 = vadd.f32 %v2175, %v2246
    %v2248 = vpop.f32.mrb[0].mxu0
    %2249 = vmatprep.mubr.bf16.mxu0 %v1210
    %2250 = vmatmul.mubr.bf16.gmra.mrb[0].mxu0 %v1209
    %v2251 = vpop.f32.mrb[0].mxu0
    %v2252 = vadd.f32 %v2175, %v2251
    %v2253 = vpop.f32.mrb[0].mxu0
    %v2254 = vpop.f32.mrb[0].mxu0
    %v2255 = vadd.f32 %v2175, %v2254
    %v2256 = vpop.f32.mrb[0].mxu0
    %2257 = vmatprep.mubr.bf16.mxu0 %v1212
    %2258 = vmatmul.mubr.bf16.gmra.mrb[0].mxu0 %v1211
    %v2259 = vpop.f32.mrb[0].mxu0
    %v2260 = vadd.f32 %v2175, %v2259
    %v2261 = vpop.f32.mrb[0].mxu0
    %v2262 = vpop.f32.mrb[0].mxu0
    %v2263 = vadd.f32 %v2175, %v2262
    %v2264 = vpop.f32.mrb[0].mxu0
    %2265 = vmatprep.mubr.bf16.mxu0 %v1214
    %2266 = vmatmul.mubr.bf16.gmra.mrb[0].mxu0 %v1213
    %v2267 = vpop.f32.mrb[0].mxu0
    %v2268 = vadd.f32 %v2175, %v2267
    %v2269 = vpop.f32.mrb[0].mxu0
    %v2270 = vpop.f32.mrb[0].mxu0
    %v2271 = vadd.f32 %v2175, %v2270
    %v2272 = vpop.f32.mrb[0].mxu0
    %2273 = vmatprep.mubr.bf16.mxu0 %v1216
    %2274 = vmatmul.mubr.bf16.gmra.mrb[0].mxu0 %v1215
    %v2275 = vpop.f32.mrb[0].mxu0
    %v2276 = vadd.f32 %v2175, %v2275
    %v2277 = vpop.f32.mrb[0].mxu0
    %v2278 = vpop.f32.mrb[0].mxu0
    %v2279 = vadd.f32 %v2175, %v2278
    %v2280 = vpop.f32.mrb[0].mxu0
    %2281 = vmatprep.mubr.bf16.mxu0 %v1218
    %2282 = vmatmul.mubr.bf16.gmra.mrb[0].mxu0 %v1217
    %v2283 = vpop.f32.mrb[0].mxu0
    %v2284 = vadd.f32 %v2175, %v2283
    %v2285 = vpop.f32.mrb[0].mxu0
    %v2286 = vpop.f32.mrb[0].mxu0
    %v2287 = vadd.f32 %v2175, %v2286
    %v2288 = vpop.f32.mrb[0].mxu0
    %2289 = vmatprep.mubr.bf16.mxu0 %v1220
    %2290 = vmatmul.mubr.bf16.gmra.mrb[0].mxu0 %v1219
    %v2291 = vpop.f32.mrb[0].mxu0
    %v2292 = vadd.f32 %v2175, %v2291
    %v2293 = vpop.f32.mrb[0].mxu0
    %v2294 = vpop.f32.mrb[0].mxu0
    %v2295 = vadd.f32 %v2175, %v2294
    %v2296 = vpop.f32.mrb[0].mxu0
    %2297 = vmatprep.mubr.bf16.mxu0 %v1222
    %2298 = vmatmul.mubr.bf16.gmra.mrb[0].mxu0 %v1221
    %v2299 = vpop.f32.mrb[0].mxu0
    %v2300 = vadd.f32 %v2175, %v2299
    %v2301 = vpop.f32.mrb[0].mxu0
    %v2302 = vpop.f32.mrb[0].mxu0
    %v2303 = vadd.f32 %v2175, %v2302
    %v2304 = vpop.f32.mrb[0].mxu0
    %2305 = vmatprep.mubr.bf16.mxu0 %v1224
    %2306 = vmatmul.mubr.bf16.gmra.mrb[0].mxu0 %v1223
    %v2307 = vpop.f32.mrb[0].mxu0
    %v2308 = vadd.f32 %v2175, %v2307
    %v2309 = vpop.f32.mrb[0].mxu0
    %v2310 = vpop.f32.mrb[0].mxu0
    %v2311 = vadd.f32 %v2175, %v2310
    %v2312 = vpop.f32.mrb[0].mxu0
    %2313 = vmatprep.mubr.bf16.mxu0 %v1226
    %2314 = vmatmul.mubr.bf16.gmra.mrb[0].mxu0 %v1225
    %v2315 = vpop.f32.mrb[0].mxu0
    %v2316 = vadd.f32 %v2175, %v2315
    %v2317 = vpop.f32.mrb[0].mxu0
    %v2318 = vpop.f32.mrb[0].mxu0
    %v2319 = vadd.f32 %v2175, %v2318
    %v2320 = vpop.f32.mrb[0].mxu0
    %2321 = vmatprep.mubr.bf16.mxu0 %v1228
    %2322 = vmatmul.mubr.bf16.gmra.mrb[0].mxu0 %v1227
    %v2323 = vpop.f32.mrb[0].mxu0
    %v2324 = vadd.f32 %v2175, %v2323
    %v2325 = vpop.f32.mrb[0].mxu0
    %v2326 = vpop.f32.mrb[0].mxu0
    %v2327 = vadd.f32 %v2175, %v2326
    %v2328 = vpop.f32.mrb[0].mxu0
    %2329 = vmatprep.mubr.bf16.mxu0 %v1230
    %2330 = vmatmul.mubr.bf16.gmra.mrb[0].mxu0 %v1229
    %v2331 = vpop.f32.mrb[0].mxu0
    %v2332 = vadd.f32 %v2175, %v2331
    %v2333 = vpop.f32.mrb[0].mxu0
    %v2334 = vpop.f32.mrb[0].mxu0
    %v2335 = vadd.f32 %v2175, %v2334
    %v2336 = vpop.f32.mrb[0].mxu0
    %2337 = vdwg.mxu0
    %v2338 = vmax.f32 %v2212, 0.0
    %v2339 = vmax.f32 %v2215, 0.0
    %v2340 = vmax.f32 %v2220, 0.0
    %v2341 = vmax.f32 %v2223, 0.0
    %v2342 = vmax.f32 %v2228, 0.0
    %v2343 = vmax.f32 %v2231, 0.0
    %v2344 = vmax.f32 %v2236, 0.0
    %v2345 = vmax.f32 %v2239, 0.0
    %v2346 = vmax.f32 %v2244, 0.0
    %v2347 = vmax.f32 %v2247, 0.0
    %v2348 = vmax.f32 %v2252, 0.0
    %v2349 = vmax.f32 %v2255, 0.0
    %v2350 = vmax.f32 %v2260, 0.0
    %v2351 = vmax.f32 %v2263, 0.0
    %v2352 = vmax.f32 %v2268, 0.0
    %v2353 = vmax.f32 %v2271, 0.0
    %v2354 = vmax.f32 %v2276, 0.0
    %v2355 = vmax.f32 %v2279, 0.0
    %v2356 = vmax.f32 %v2284, 0.0
    %v2357 = vmax.f32 %v2287, 0.0
    %v2358 = vmax.f32 %v2292, 0.0
    %v2359 = vmax.f32 %v2295, 0.0
    %v2360 = vmax.f32 %v2300, 0.0
    %v2361 = vmax.f32 %v2303, 0.0
    %v2362 = vmax.f32 %v2308, 0.0
    %v2363 = vmax.f32 %v2311, 0.0
    %v2364 = vmax.f32 %v2316, 0.0
    %v2365 = vmax.f32 %v2319, 0.0
    %v2366 = vmax.f32 %v2324, 0.0
    %v2367 = vmax.f32 %v2327, 0.0
    %v2368 = vmax.f32 %v2332, 0.0
    %v2369 = vmax.f32 %v2335, 0.0
    %v2370 = vpack.c.bf16 %v2339, %v2338
    %v2371 = vpack.c.bf16 %v2341, %v2340
    %v2372 = vpack.c.bf16 %v2343, %v2342
    %v2373 = vpack.c.bf16 %v2345, %v2344
    %v2374 = vpack.c.bf16 %v2347, %v2346
    %v2375 = vpack.c.bf16 %v2349, %v2348
    %v2376 = vpack.c.bf16 %v2351, %v2350
    %v2377 = vpack.c.bf16 %v2353, %v2352
    %v2378 = vpack.c.bf16 %v2355, %v2354
    %v2379 = vpack.c.bf16 %v2357, %v2356
    %v2380 = vpack.c.bf16 %v2359, %v2358
    %v2381 = vpack.c.bf16 %v2361, %v2360
    %v2382 = vpack.c.bf16 %v2363, %v2362
    %v2383 = vpack.c.bf16 %v2365, %v2364
    %v2384 = vpack.c.bf16 %v2367, %v2366
    %v2385 = vpack.c.bf16 %v2369, %v2368
    %v2386 = vld [vmem:[%s11] sm:$0xf]
    %v2387 = vld [vmem:[%s11 + $0x4] sm:$0xf]
    %v2388 = vld [vmem:[%s11 + $0x8] sm:$0xf]
    %v2389 = vld [vmem:[%s11 + $0xc] sm:$0xf]
    %v2390 = vld [vmem:[%s11 + $0x10] sm:$0xf]
    %v2391 = vld [vmem:[%s11 + $0x14] sm:$0xf]
    %v2392 = vld [vmem:[%s11 + $0x18] sm:$0xf]
    %v2393 = vld [vmem:[%s11 + $0x1c] sm:$0xf]
    %v2394 = vld [vmem:[%s11 + $0x20] sm:$0xf]
    %v2395 = vld [vmem:[%s11 + $0x24] sm:$0xf]
    %v2396 = vld [vmem:[%s11 + $0x28] sm:$0xf]
    %v2397 = vld [vmem:[%s11 + $0x2c] sm:$0xf]
    %v2398 = vld [vmem:[%s11 + $0x30] sm:$0xf]
    %v2399 = vld [vmem:[%s11 + $0x34] sm:$0xf]
    %v2400 = vld [vmem:[%s11 + $0x38] sm:$0xf]
    %v2401 = vld [vmem:[%s11 + $0x3c] sm:$0xf]
    %v2418 = vunpack.c.l.b16 %v2386
    %v2419 = vunpack.c.l.b16 %v2387
    %v2420 = vunpack.c.l.b16 %v2388
    %v2421 = vunpack.c.l.b16 %v2389
    %v2422 = vunpack.c.l.b16 %v2390
    %v2423 = vunpack.c.l.b16 %v2391
    %v2424 = vunpack.c.l.b16 %v2392
    %v2425 = vunpack.c.l.b16 %v2393
    %v2426 = vunpack.c.l.b16 %v2394
    %v2427 = vunpack.c.l.b16 %v2395
    %v2428 = vunpack.c.l.b16 %v2396
    %v2429 = vunpack.c.l.b16 %v2397
    %v2430 = vunpack.c.l.b16 %v2398
    %v2431 = vunpack.c.l.b16 %v2399
    %v2432 = vunpack.c.l.b16 %v2400
    %v2433 = vunpack.c.l.b16 %v2401
    %v2434 = vpack.c.b16 %v2419, %v2418
    %v2435 = vpack.c.b16 %v2421, %v2420
    %v2436 = vpack.c.b16 %v2423, %v2422
    %v2437 = vpack.c.b16 %v2425, %v2424
    %v2438 = vpack.c.b16 %v2427, %v2426
    %v2439 = vpack.c.b16 %v2429, %v2428
    %v2440 = vpack.c.b16 %v2431, %v2430
    %v2441 = vpack.c.b16 %v2433, %v2432
    %2450 = vmatprep.subr.bf16.mxu0 0
    %2451 = vmatpush1.bf16.msra.mxu0 %v2434
    %2452 = vmatprep.subr.bf16.mxu0 0
    %2453 = vmatpush1.bf16.msra.mxu0 %v2435
    %2454 = vmatprep.subr.bf16.mxu0 0
    %2455 = vmatpush1.bf16.msra.mxu0 %v2436
    %2456 = vmatprep.subr.bf16.mxu0 0
    %2457 = vmatpush1.bf16.msra.mxu0 %v2437
    %2458 = vmatprep.subr.bf16.mxu0 0
    %2459 = vmatpush1.bf16.msra.mxu0 %v2438
    %2460 = vmatprep.subr.bf16.mxu0 0
    %2461 = vmatpush1.bf16.msra.mxu0 %v2439
    %2462 = vmatprep.subr.bf16.mxu0 0
    %2463 = vmatpush1.bf16.msra.mxu0 %v2440
    %2464 = vmatprep.subr.bf16.mxu0 0
    %2465 = vmatpush1.bf16.msra.mxu0 %v2441
    %2466 = vmatprep.subr.bf16.mxu0 0
    %2467 = vmatpush1.bf16.msra.mxu0 0
    %2468 = vmatprep.subr.bf16.mxu0 0
    %2469 = vmatpush1.bf16.msra.mxu0 0
    %2470 = vmatprep.subr.bf16.mxu0 0
    %2471 = vmatpush1.bf16.msra.mxu0 0
    %2472 = vmatprep.subr.bf16.mxu0 0
    %2473 = vmatpush1.bf16.msra.mxu0 0
    %2474 = vmatprep.subr.bf16.mxu0 0
    %2475 = vmatpush1.bf16.msra.mxu0 0
    %2476 = vmatprep.subr.bf16.mxu0 0
    %2477 = vmatpush1.bf16.msra.mxu0 0
    %2478 = vmatprep.subr.bf16.mxu0 0
    %2479 = vmatpush1.bf16.msra.mxu0 0
    %2480 = vmatprep.subr.bf16.mxu0 0
    %2481 = vmatpush1.bf16.msra.mxu0 0
    %2482 = vmatprep.mubr.bf16.mxu0 0
    %2483 = vmatmul.mubr.bf16.gmra.mrb[0].mxu0 %v2370
    %v2484 = vpop.f32.mrb[0].mxu0
    %v2485 = vadd.f32 0.0, %v2484
    %v2486 = vpop.f32.mrb[0].mxu0
    %v2487 = vpop.f32.mrb[0].mxu0
    %v2488 = vadd.f32 0.0, %v2487
    %v2489 = vpop.f32.mrb[0].mxu0
    %2490 = vmatprep.mubr.bf16.mxu0 0
    %2491 = vmatmul.mubr.bf16.gmra.mrb[0].mxu0 %v2371
    %v2492 = vpop.f32.mrb[0].mxu0
    %v2493 = vadd.f32 0.0, %v2492
    %v2494 = vpop.f32.mrb[0].mxu0
    %v2495 = vpop.f32.mrb[0].mxu0
    %v2496 = vadd.f32 0.0, %v2495
    %v2497 = vpop.f32.mrb[0].mxu0
    %2498 = vmatprep.mubr.bf16.mxu0 0
    %2499 = vmatmul.mubr.bf16.gmra.mrb[0].mxu0 %v2372
    %v2500 = vpop.f32.mrb[0].mxu0
    %v2501 = vadd.f32 0.0, %v2500
    %v2502 = vpop.f32.mrb[0].mxu0
    %v2503 = vpop.f32.mrb[0].mxu0
    %v2504 = vadd.f32 0.0, %v2503
    %v2505 = vpop.f32.mrb[0].mxu0
    %2506 = vmatprep.mubr.bf16.mxu0 0
    %2507 = vmatmul.mubr.bf16.gmra.mrb[0].mxu0 %v2373
    %v2508 = vpop.f32.mrb[0].mxu0
    %v2509 = vadd.f32 0.0, %v2508
    %v2510 = vpop.f32.mrb[0].mxu0
    %v2511 = vpop.f32.mrb[0].mxu0
    %v2512 = vadd.f32 0.0, %v2511
    %v2513 = vpop.f32.mrb[0].mxu0
    %2514 = vmatprep.mubr.bf16.mxu0 0
    %2515 = vmatmul.mubr.bf16.gmra.mrb[0].mxu0 %v2374
    %v2516 = vpop.f32.mrb[0].mxu0
    %v2517 = vadd.f32 0.0, %v2516
    %v2518 = vpop.f32.mrb[0].mxu0
    %v2519 = vpop.f32.mrb[0].mxu0
    %v2520 = vadd.f32 0.0, %v2519
    %v2521 = vpop.f32.mrb[0].mxu0
    %2522 = vmatprep.mubr.bf16.mxu0 0
    %2523 = vmatmul.mubr.bf16.gmra.mrb[0].mxu0 %v2375
    %v2524 = vpop.f32.mrb[0].mxu0
    %v2525 = vadd.f32 0.0, %v2524
    %v2526 = vpop.f32.mrb[0].mxu0
    %v2527 = vpop.f32.mrb[0].mxu0
    %v2528 = vadd.f32 0.0, %v2527
    %v2529 = vpop.f32.mrb[0].mxu0
    %2530 = vmatprep.mubr.bf16.mxu0 0
    %2531 = vmatmul.mubr.bf16.gmra.mrb[0].mxu0 %v2376
    %v2532 = vpop.f32.mrb[0].mxu0
    %v2533 = vadd.f32 0.0, %v2532
    %v2534 = vpop.f32.mrb[0].mxu0
    %v2535 = vpop.f32.mrb[0].mxu0
    %v2536 = vadd.f32 0.0, %v2535
    %v2537 = vpop.f32.mrb[0].mxu0
    %2538 = vmatprep.mubr.bf16.mxu0 0
    %2539 = vmatmul.mubr.bf16.gmra.mrb[0].mxu0 %v2377
    %v2540 = vpop.f32.mrb[0].mxu0
    %v2541 = vadd.f32 0.0, %v2540
    %v2542 = vpop.f32.mrb[0].mxu0
    %v2543 = vpop.f32.mrb[0].mxu0
    %v2544 = vadd.f32 0.0, %v2543
    %v2545 = vpop.f32.mrb[0].mxu0
    %2546 = vmatprep.mubr.bf16.mxu0 0
    %2547 = vmatmul.mubr.bf16.gmra.mrb[0].mxu0 %v2378
    %v2548 = vpop.f32.mrb[0].mxu0
    %v2549 = vadd.f32 0.0, %v2548
    %v2550 = vpop.f32.mrb[0].mxu0
    %v2551 = vpop.f32.mrb[0].mxu0
    %v2552 = vadd.f32 0.0, %v2551
    %v2553 = vpop.f32.mrb[0].mxu0
    %2554 = vmatprep.mubr.bf16.mxu0 0
    %2555 = vmatmul.mubr.bf16.gmra.mrb[0].mxu0 %v2379
    %v2556 = vpop.f32.mrb[0].mxu0
    %v2557 = vadd.f32 0.0, %v2556
    %v2558 = vpop.f32.mrb[0].mxu0
    %v2559 = vpop.f32.mrb[0].mxu0
    %v2560 = vadd.f32 0.0, %v2559
    %v2561 = vpop.f32.mrb[0].mxu0
    %2562 = vmatprep.mubr.bf16.mxu0 0
    %2563 = vmatmul.mubr.bf16.gmra.mrb[0].mxu0 %v2380
    %v2564 = vpop.f32.mrb[0].mxu0
    %v2565 = vadd.f32 0.0, %v2564
    %v2566 = vpop.f32.mrb[0].mxu0
    %v2567 = vpop.f32.mrb[0].mxu0
    %v2568 = vadd.f32 0.0, %v2567
    %v2569 = vpop.f32.mrb[0].mxu0
    %2570 = vmatprep.mubr.bf16.mxu0 0
    %2571 = vmatmul.mubr.bf16.gmra.mrb[0].mxu0 %v2381
    %v2572 = vpop.f32.mrb[0].mxu0
    %v2573 = vadd.f32 0.0, %v2572
    %v2574 = vpop.f32.mrb[0].mxu0
    %v2575 = vpop.f32.mrb[0].mxu0
    %v2576 = vadd.f32 0.0, %v2575
    %v2577 = vpop.f32.mrb[0].mxu0
    %2578 = vmatprep.mubr.bf16.mxu0 0
    %2579 = vmatmul.mubr.bf16.gmra.mrb[0].mxu0 %v2382
    %v2580 = vpop.f32.mrb[0].mxu0
    %v2581 = vadd.f32 0.0, %v2580
    %v2582 = vpop.f32.mrb[0].mxu0
    %v2583 = vpop.f32.mrb[0].mxu0
    %v2584 = vadd.f32 0.0, %v2583
    %v2585 = vpop.f32.mrb[0].mxu0
    %2586 = vmatprep.mubr.bf16.mxu0 0
    %2587 = vmatmul.mubr.bf16.gmra.mrb[0].mxu0 %v2383
    %v2588 = vpop.f32.mrb[0].mxu0
    %v2589 = vadd.f32 0.0, %v2588
    %v2590 = vpop.f32.mrb[0].mxu0
    %v2591 = vpop.f32.mrb[0].mxu0
    %v2592 = vadd.f32 0.0, %v2591
    %v2593 = vpop.f32.mrb[0].mxu0
    %2594 = vmatprep.mubr.bf16.mxu0 0
    %2595 = vmatmul.mubr.bf16.gmra.mrb[0].mxu0 %v2384
    %v2596 = vpop.f32.mrb[0].mxu0
    %v2597 = vadd.f32 0.0, %v2596
    %v2598 = vpop.f32.mrb[0].mxu0
    %v2599 = vpop.f32.mrb[0].mxu0
    %v2600 = vadd.f32 0.0, %v2599
    %v2601 = vpop.f32.mrb[0].mxu0
    %2602 = vmatprep.mubr.bf16.mxu0 0
    %2603 = vmatmul.mubr.bf16.gmra.mrb[0].mxu0 %v2385
    %v2604 = vpop.f32.mrb[0].mxu0
    %v2605 = vadd.f32 0.0, %v2604
    %v2606 = vpop.f32.mrb[0].mxu0
    %v2607 = vpop.f32.mrb[0].mxu0
    %v2608 = vadd.f32 0.0, %v2607
    %v2609 = vpop.f32.mrb[0].mxu0
    %2610 = vdwg.mxu0
    %v2611 = vpack.c.bf16 %v2488, %v2485
    %v2612 = vpack.c.bf16 %v2496, %v2493
    %v2613 = vpack.c.bf16 %v2504, %v2501
    %v2614 = vpack.c.bf16 %v2512, %v2509
    %v2615 = vpack.c.bf16 %v2520, %v2517
    %v2616 = vpack.c.bf16 %v2528, %v2525
    %v2617 = vpack.c.bf16 %v2536, %v2533
    %v2618 = vpack.c.bf16 %v2544, %v2541
    %v2619 = vpack.c.bf16 %v2552, %v2549
    %v2620 = vpack.c.bf16 %v2560, %v2557
    %v2621 = vpack.c.bf16 %v2568, %v2565
    %v2622 = vpack.c.bf16 %v2576, %v2573
    %v2623 = vpack.c.bf16 %v2584, %v2581
    %v2624 = vpack.c.bf16 %v2592, %v2589
    %v2625 = vpack.c.bf16 %v2600, %v2597
    %v2626 = vpack.c.bf16 %v2608, %v2605
    %v2627 = vld [vmem:[%s12] sm:$0x1]
    %v2629 = vlaneseq
    %v2630 = vshrl.u32 %v2629, 7
    %v2631 = vsub.s32 0, %v2630
    %v2632 = vrot.slane %v2627, %v2631
    %2634 = vmatprep.subr.bf16.mxu0 0
    %2635 = vmatpush1.bf16.msra.mxu0 %v2611
    %2636 = vmatprep.subr.bf16.mxu0 0
    %2637 = vmatpush1.bf16.msra.mxu0 %v2612
    %2638 = vmatprep.subr.bf16.mxu0 0
    %2639 = vmatpush1.bf16.msra.mxu0 %v2613
    %2640 = vmatprep.subr.bf16.mxu0 0
    %2641 = vmatpush1.bf16.msra.mxu0 %v2614
    %2642 = vmatprep.subr.bf16.mxu0 0
    %2643 = vmatpush1.bf16.msra.mxu0 %v2615
    %2644 = vmatprep.subr.bf16.mxu0 0
    %2645 = vmatpush1.bf16.msra.mxu0 %v2616
    %2646 = vmatprep.subr.bf16.mxu0 0
    %2647 = vmatpush1.bf16.msra.mxu0 %v2617
    %2648 = vmatprep.subr.bf16.mxu0 0
    %2649 = vmatpush1.bf16.msra.mxu0 %v2618
    %2650 = vmatprep.subr.bf16.mxu0 0
    %2651 = vmatpush1.bf16.msra.mxu0 %v2619
    %2652 = vmatprep.subr.bf16.mxu0 0
    %2653 = vmatpush1.bf16.msra.mxu0 %v2620
    %2654 = vmatprep.subr.bf16.mxu0 0
    %2655 = vmatpush1.bf16.msra.mxu0 %v2621
    %2656 = vmatprep.subr.bf16.mxu0 0
    %2657 = vmatpush1.bf16.msra.mxu0 %v2622
    %2658 = vmatprep.subr.bf16.mxu0 0
    %2659 = vmatpush1.bf16.msra.mxu0 %v2623
    %2660 = vmatprep.subr.bf16.mxu0 0
    %2661 = vmatpush1.bf16.msra.mxu0 %v2624
    %2662 = vmatprep.subr.bf16.mxu0 0
    %2663 = vmatpush1.bf16.msra.mxu0 %v2625
    %2664 = vmatprep.subr.bf16.mxu0 0
    %2665 = vmatpush1.bf16.msra.mxu0 %v2626
    %2666 = vmatprep.mubr.bf16.mxu0 %v583
    %2667 = vmatmul.mubr.bf16.gmra.mrb[0].mxu0 %v582
    %v2668 = vpop.f32.mrb[0].mxu0
    %v2669 = vadd.f32 %v2632, %v2668
    %v2670 = vpop.f32.mrb[0].mxu0
    %v2671 = vpop.f32.mrb[0].mxu0
    %v2672 = vadd.f32 %v2632, %v2671
    %v2673 = vpop.f32.mrb[0].mxu0
    %2674 = vmatprep.mubr.bf16.mxu0 %v585
    %2675 = vmatmul.mubr.bf16.gmra.mrb[0].mxu0 %v584
    %v2676 = vpop.f32.mrb[0].mxu0
    %v2677 = vadd.f32 %v2632, %v2676
    %v2678 = vpop.f32.mrb[0].mxu0
    %v2679 = vpop.f32.mrb[0].mxu0
    %v2680 = vadd.f32 %v2632, %v2679
    %v2681 = vpop.f32.mrb[0].mxu0
    %2682 = vmatprep.mubr.bf16.mxu0 %v587
    %2683 = vmatmul.mubr.bf16.gmra.mrb[0].mxu0 %v586
    %v2684 = vpop.f32.mrb[0].mxu0
    %v2685 = vadd.f32 %v2632, %v2684
    %v2686 = vpop.f32.mrb[0].mxu0
    %v2687 = vpop.f32.mrb[0].mxu0
    %v2688 = vadd.f32 %v2632, %v2687
    %v2689 = vpop.f32.mrb[0].mxu0
    %2690 = vmatprep.mubr.bf16.mxu0 %v589
    %2691 = vmatmul.mubr.bf16.gmra.mrb[0].mxu0 %v588
    %v2692 = vpop.f32.mrb[0].mxu0
    %v2693 = vadd.f32 %v2632, %v2692
    %v2694 = vpop.f32.mrb[0].mxu0
    %v2695 = vpop.f32.mrb[0].mxu0
    %v2696 = vadd.f32 %v2632, %v2695
    %v2697 = vpop.f32.mrb[0].mxu0
    %2698 = vmatprep.mubr.bf16.mxu0 %v591
    %2699 = vmatmul.mubr.bf16.gmra.mrb[0].mxu0 %v590
    %v2700 = vpop.f32.mrb[0].mxu0
    %v2701 = vadd.f32 %v2632, %v2700
    %v2702 = vpop.f32.mrb[0].mxu0
    %v2703 = vpop.f32.mrb[0].mxu0
    %v2704 = vadd.f32 %v2632, %v2703
    %v2705 = vpop.f32.mrb[0].mxu0
    %2706 = vmatprep.mubr.bf16.mxu0 %v593
    %2707 = vmatmul.mubr.bf16.gmra.mrb[0].mxu0 %v592
    %v2708 = vpop.f32.mrb[0].mxu0
    %v2709 = vadd.f32 %v2632, %v2708
    %v2710 = vpop.f32.mrb[0].mxu0
    %v2711 = vpop.f32.mrb[0].mxu0
    %v2712 = vadd.f32 %v2632, %v2711
    %v2713 = vpop.f32.mrb[0].mxu0
    %2714 = vmatprep.mubr.bf16.mxu0 %v595
    %2715 = vmatmul.mubr.bf16.gmra.mrb[0].mxu0 %v594
    %v2716 = vpop.f32.mrb[0].mxu0
    %v2717 = vadd.f32 %v2632, %v2716
    %v2718 = vpop.f32.mrb[0].mxu0
    %v2719 = vpop.f32.mrb[0].mxu0
    %v2720 = vadd.f32 %v2632, %v2719
    %v2721 = vpop.f32.mrb[0].mxu0
    %2722 = vmatprep.mubr.bf16.mxu0 %v597
    %2723 = vmatmul.mubr.bf16.gmra.mrb[0].mxu0 %v596
    %v2724 = vpop.f32.mrb[0].mxu0
    %v2725 = vadd.f32 %v2632, %v2724
    %v2726 = vpop.f32.mrb[0].mxu0
    %v2727 = vpop.f32.mrb[0].mxu0
    %v2728 = vadd.f32 %v2632, %v2727
    %v2729 = vpop.f32.mrb[0].mxu0
    %2730 = vmatprep.mubr.bf16.mxu0 %v599
    %2731 = vmatmul.mubr.bf16.gmra.mrb[0].mxu0 %v598
    %v2732 = vpop.f32.mrb[0].mxu0
    %v2733 = vadd.f32 %v2632, %v2732
    %v2734 = vpop.f32.mrb[0].mxu0
    %v2735 = vpop.f32.mrb[0].mxu0
    %v2736 = vadd.f32 %v2632, %v2735
    %v2737 = vpop.f32.mrb[0].mxu0
    %2738 = vmatprep.mubr.bf16.mxu0 %v601
    %2739 = vmatmul.mubr.bf16.gmra.mrb[0].mxu0 %v600
    %v2740 = vpop.f32.mrb[0].mxu0
    %v2741 = vadd.f32 %v2632, %v2740
    %v2742 = vpop.f32.mrb[0].mxu0
    %v2743 = vpop.f32.mrb[0].mxu0
    %v2744 = vadd.f32 %v2632, %v2743
    %v2745 = vpop.f32.mrb[0].mxu0
    %2746 = vmatprep.mubr.bf16.mxu0 %v603
    %2747 = vmatmul.mubr.bf16.gmra.mrb[0].mxu0 %v602
    %v2748 = vpop.f32.mrb[0].mxu0
    %v2749 = vadd.f32 %v2632, %v2748
    %v2750 = vpop.f32.mrb[0].mxu0
    %v2751 = vpop.f32.mrb[0].mxu0
    %v2752 = vadd.f32 %v2632, %v2751
    %v2753 = vpop.f32.mrb[0].mxu0
    %2754 = vmatprep.mubr.bf16.mxu0 %v605
    %2755 = vmatmul.mubr.bf16.gmra.mrb[0].mxu0 %v604
    %v2756 = vpop.f32.mrb[0].mxu0
    %v2757 = vadd.f32 %v2632, %v2756
    %v2758 = vpop.f32.mrb[0].mxu0
    %v2759 = vpop.f32.mrb[0].mxu0
    %v2760 = vadd.f32 %v2632, %v2759
    %v2761 = vpop.f32.mrb[0].mxu0
    %2762 = vmatprep.mubr.bf16.mxu0 %v607
    %2763 = vmatmul.mubr.bf16.gmra.mrb[0].mxu0 %v606
    %v2764 = vpop.f32.mrb[0].mxu0
    %v2765 = vadd.f32 %v2632, %v2764
    %v2766 = vpop.f32.mrb[0].mxu0
    %v2767 = vpop.f32.mrb[0].mxu0
    %v2768 = vadd.f32 %v2632, %v2767
    %v2769 = vpop.f32.mrb[0].mxu0
    %2770 = vmatprep.mubr.bf16.mxu0 %v609
    %2771 = vmatmul.mubr.bf16.gmra.mrb[0].mxu0 %v608
    %v2772 = vpop.f32.mrb[0].mxu0
    %v2773 = vadd.f32 %v2632, %v2772
    %v2774 = vpop.f32.mrb[0].mxu0
    %v2775 = vpop.f32.mrb[0].mxu0
    %v2776 = vadd.f32 %v2632, %v2775
    %v2777 = vpop.f32.mrb[0].mxu0
    %2778 = vmatprep.mubr.bf16.mxu0 %v611
    %2779 = vmatmul.mubr.bf16.gmra.mrb[0].mxu0 %v610
    %v2780 = vpop.f32.mrb[0].mxu0
    %v2781 = vadd.f32 %v2632, %v2780
    %v2782 = vpop.f32.mrb[0].mxu0
    %v2783 = vpop.f32.mrb[0].mxu0
    %v2784 = vadd.f32 %v2632, %v2783
    %v2785 = vpop.f32.mrb[0].mxu0
    %2786 = vmatprep.mubr.bf16.mxu0 %v613
    %2787 = vmatmul.mubr.bf16.gmra.mrb[0].mxu0 %v612
    %v2788 = vpop.f32.mrb[0].mxu0
    %v2789 = vadd.f32 %v2632, %v2788
    %v2790 = vpop.f32.mrb[0].mxu0
    %v2791 = vpop.f32.mrb[0].mxu0
    %v2792 = vadd.f32 %v2632, %v2791
    %v2793 = vpop.f32.mrb[0].mxu0
    %2794 = vdwg.mxu0
    %2795 = vst [vmem:[#allocation2] sm:$0xff] %v2669
    %2796 = vst [vmem:[#allocation2 + $0x8] sm:$0xff] %v2672
    %2797 = vst [vmem:[#allocation2 + $0x10] sm:$0xff] %v2677
    %2798 = vst [vmem:[#allocation2 + $0x18] sm:$0xff] %v2680
    %2799 = vst [vmem:[#allocation2 + $0x20] sm:$0xff] %v2685
    %2800 = vst [vmem:[#allocation2 + $0x28] sm:$0xff] %v2688
    %2801 = vst [vmem:[#allocation2 + $0x30] sm:$0xff] %v2693
    %2802 = vst [vmem:[#allocation2 + $0x38] sm:$0xff] %v2696
    %2803 = vst [vmem:[#allocation2 + $0x40] sm:$0xff] %v2701
    %2804 = vst [vmem:[#allocation2 + $0x48] sm:$0xff] %v2704
    %2805 = vst [vmem:[#allocation2 + $0x50] sm:$0xff] %v2709
    %2806 = vst [vmem:[#allocation2 + $0x58] sm:$0xff] %v2712
    %2807 = vst [vmem:[#allocation2 + $0x60] sm:$0xff] %v2717
    %2808 = vst [vmem:[#allocation2 + $0x68] sm:$0xff] %v2720
    %2809 = vst [vmem:[#allocation2 + $0x70] sm:$0xff] %v2725
    %2810 = vst [vmem:[#allocation2 + $0x78] sm:$0xff] %v2728
    %2811 = vst [vmem:[#allocation2 + $0x80] sm:$0xff] %v2733
    %2812 = vst [vmem:[#allocation2 + $0x88] sm:$0xff] %v2736
    %2813 = vst [vmem:[#allocation2 + $0x90] sm:$0xff] %v2741
    %2814 = vst [vmem:[#allocation2 + $0x98] sm:$0xff] %v2744
    %2815 = vst [vmem:[#allocation2 + $0xa0] sm:$0xff] %v2749
    %2816 = vst [vmem:[#allocation2 + $0xa8] sm:$0xff] %v2752
    %2817 = vst [vmem:[#allocation2 + $0xb0] sm:$0xff] %v2757
    %2818 = vst [vmem:[#allocation2 + $0xb8] sm:$0xff] %v2760
    %2819 = vst [vmem:[#allocation2 + $0xc0] sm:$0xff] %v2765
    %2820 = vst [vmem:[#allocation2 + $0xc8] sm:$0xff] %v2768
    %2821 = vst [vmem:[#allocation2 + $0xd0] sm:$0xff] %v2773
    %2822 = vst [vmem:[#allocation2 + $0xd8] sm:$0xff] %v2776
    %2823 = vst [vmem:[#allocation2 + $0xe0] sm:$0xff] %v2781
    %2824 = vst [vmem:[#allocation2 + $0xe8] sm:$0xff] %v2784
    %2825 = vst [vmem:[#allocation2 + $0xf0] sm:$0xff] %v2789
    %2826 = vst [vmem:[#allocation2 + $0xf8] sm:$0xff] %v2792
    // Predicated region
    $region54: #{cross_gcn_forward.1} parent=1 // pred_check
      _
    $region55: #{cross_gcn_forward.1} parent=1 // pred_check_branch
      %2828 = sbr.rel (0) target = $region57
    $region56: #{cross_gcn_forward.1} parent=1 // pred_region
      %s2830 = ssub.s32 4096, 4096
      %2831 = vsyncadd [#allocation3], %s2830
      %s2832 = sshll.u32 [#allocation2], 4
      %s2833 = int_to_ptr.vmem [resolvable:$true] %s2832
      %2838 = dma.vmem_to_hbm [thread:$0]  %s2833, 4096, %s13, [#allocation3], 128, 128, 8
    $region57: #{cross_gcn_forward.1} parent=1 // pred_fallthru
      _
    // Predicated region
    $region58: #{cross_gcn_forward.1} parent=1 // pred_check
      _
    $region59: #{cross_gcn_forward.1} parent=1 // pred_check_branch
      %2840 = sbr.rel (0) target = $region61
    $region60: #{cross_gcn_forward.1} parent=1 // pred_region
      %2841 = dma.done [#allocation3], 4096
    $region61: #{cross_gcn_forward.1} parent=1 // pred_fallthru
      _
    %2842 = vsyncpa [#allocation3], 1

</llo_original>
